<compile_context>
chip_gen: v6e
topology: v6e:2x2x1
jax: 0.10.0
libtpu: 0.0.40
codegen_flags: <defaults>
</compile_context>

<pallas_src>
import jax
import jax.numpy as jnp
from jax.experimental import pallas as pl
from jax.experimental.pallas import tpu as pltpu


def _sigmoid(v):
    # exp and the approximate reciprocal both issue on the EUP slot,
    # keeping the VALU free for the surrounding elementwise math.
    return pl.reciprocal(1.0 + jnp.exp(-v), approx=True)


def neuromod_kernel(x_ref, ctx_ref, prev_ref, nf_ref, nl_ref,
                    w1x_ref, w1c_ref, b1_ref,
                    w2_ref, b2_ref,
                    w3_ref, b3_ref,
                    scal_ref,
                    out_ref):
    """One (TM, D) row tile; TM is a whole number of length-T sequences."""
    # ---- gating MLP: bf16 MXU inputs, f32 accumulation -------------------
    x_bf = x_ref[...].astype(jnp.bfloat16)        # (TM, D)
    ctx_bf = ctx_ref[...].astype(jnp.bfloat16)    # (TM, C)

    # fc1 on concat([x, context], -1) == x @ W1x + ctx @ W1c (split weight).
    h = (jnp.dot(x_bf, w1x_ref[...], preferred_element_type=jnp.float32)
         + jnp.dot(ctx_bf, w1c_ref[...], preferred_element_type=jnp.float32)
         + b1_ref[...])
    h = h * _sigmoid(h)                           # SiLU (dropout == identity, eval)
    h = jnp.dot(h.astype(jnp.bfloat16), w2_ref[...],
                preferred_element_type=jnp.float32) + b2_ref[...]
    h = h * _sigmoid(h)                           # SiLU
    g = jnp.dot(h.astype(jnp.bfloat16), w3_ref[...],
                preferred_element_type=jnp.float32) + b3_ref[...]
    gating = _sigmoid(g)                          # (TM, D), f32

    # ---- STDP temporal path: 3-tap FIR along time, zero-padded per seq ---
    delta = jnp.abs(x_ref[...].astype(jnp.float32)
                    - prev_ref[...].astype(jnp.float32))       # (TM, D)
    tm = delta.shape[0]
    # Sublane rolls (XLU slot) instead of concatenates; rows that would have
    # wrapped across a sequence boundary are zeroed by the precomputed
    # (TM, 1) masks (lane-broadcast multiply).
    d_m1 = pltpu.roll(delta, shift=1, axis=0) * nf_ref[...]     # delta[t-1]
    d_p1 = pltpu.roll(delta, shift=tm - 1, axis=0) * nl_ref[...]  # delta[t+1]

    k0 = scal_ref[0]
    k1 = scal_ref[1]
    k2 = scal_ref[2]
    gain = scal_ref[3]   # exp(-conv_bias) * stdp_factor * meta_gain (prefused)

    temporal = k0 * d_m1 + k1 * delta + k2 * d_p1
    out_ref[...] = (gating * jnp.exp(-temporal) * gain).astype(out_ref.dtype)


def refined_dynamic_neuromodulator(x, context, prev_activation, params,
                                   *, row_tile=512, out_dtype=None):
    B, T, D = x.shape
    C = context.shape[-1]
    N = B * T
    out_dtype = out_dtype if out_dtype is not None else x.dtype

    # Row tile = whole number of sequences that evenly divides the batch.
    segs = max(1, min(row_tile // T, B))
    while B % segs != 0:
        segs -= 1
    tm = segs * T
    if tm % 8 != 0 and tm != N:   # sublane-divisibility fallback
        tm = N
    grid = (N // tm,)

    # Flatten (B, T) -> rows (free reshapes in the wrapper).
    x2 = x.reshape(N, D)
    ctx2 = context.reshape(N, C)
    prev2 = prev_activation.reshape(N, D)

    # Per-row boundary masks for the zero-padded FIR (first / last step of
    # each sequence); tiny (N, 1) arrays computed once in the wrapper.
    t_idx = jnp.tile(jnp.arange(T, dtype=jnp.int32), B)
    nf = (t_idx != 0).astype(jnp.float32)[:, None]       # zero at t == 0
    nl = (t_idx != T - 1).astype(jnp.float32)[:, None]   # zero at t == T-1

    # Fold conv bias and the two scalar gains into one multiplier.
    gain = (jnp.exp(-params["conv_b"]) * params["stdp_factor"]
            * params["meta_gain"]).reshape(1).astype(jnp.float32)
    scalars = jnp.concatenate(
        [params["conv_w"].astype(jnp.float32), gain])    # [k0, k1, k2, gain]

    row_spec = lambda d: pl.BlockSpec((tm, d), lambda i: (i, 0))
    const_spec = lambda shape: pl.BlockSpec(shape, lambda i: (0,) * len(shape))
    smem_spec = pl.BlockSpec(memory_space=pltpu.MemorySpace.SMEM)

    out2 = pl.pallas_call(
        neuromod_kernel,
        out_shape=jax.ShapeDtypeStruct((N, D), out_dtype),
        grid=grid,
        in_specs=[
            row_spec(D),                 # x            (rows, D)
            row_spec(C),                 # context      (rows, C)
            row_spec(D),                 # prev_act     (rows, D)
            row_spec(1),                 # not-first-of-seq mask
            row_spec(1),                 # not-last-of-seq  mask
            const_spec((D, D)),          # W1x (x part of fc1 weight, transposed)
            const_spec((C, D)),          # W1c (context part of fc1 weight, transposed)
            const_spec((1, D)),          # b1
            const_spec((D, D)),          # W2^T
            const_spec((1, D)),          # b2
            const_spec((D, D)),          # W3^T
            const_spec((1, D)),          # b3
            smem_spec,                   # [k0, k1, k2, fused gain]
        ],
        out_specs=row_spec(D),
        compiler_params=pltpu.CompilerParams(
            dimension_semantics=("parallel",),
            vmem_limit_bytes=64 * 1024 * 1024,
        ),
    )(x2, ctx2, prev2, nf, nl,
      params["w1x"], params["w1c"], params["b1"],
      params["w2"], params["b2"],
      params["w3"], params["b3"],
      scalars)

    return out2.reshape(B, T, D)


def reference_forward(x, context, prev, p):
    """Pure-JAX (f32) replica of the PyTorch forward in eval mode."""
    w1 = jnp.concatenate([p["w1x"].astype(jnp.float32),
                          p["w1c"].astype(jnp.float32)], axis=0)
    xin = jnp.concatenate([x, context], axis=-1)
    h = jax.nn.silu(xin @ w1 + p["b1"][0])
    h = jax.nn.silu(h @ p["w2"].astype(jnp.float32) + p["b2"][0])
    gating = jax.nn.sigmoid(h @ p["w3"].astype(jnp.float32) + p["b3"][0])

    delta = jnp.abs(x - prev)
    d_m1 = jnp.pad(delta, ((0, 0), (1, 0), (0, 0)))[:, :-1, :]
    d_p1 = jnp.pad(delta, ((0, 0), (0, 1), (0, 0)))[:, 1:, :]
    k = p["conv_w"]
    temporal = k[0] * d_m1 + k[1] * delta + k[2] * d_p1 + p["conv_b"]
    stdp = jnp.exp(-temporal) * p["stdp_factor"]
    return gating * stdp * p["meta_gain"]


def init_params(key, n_embd, context_dim, kernel_size=3):
    ks = jax.random.split(key, 8)
    D, C = n_embd, context_dim
    s = 0.05
    return {
        # PyTorch Linear stores (out, in); we keep (in, out) == weight.T so
        # the kernel computes x @ W.  Matmul weights live in bf16 (MXU).
        "w1x": (s * jax.random.normal(ks[0], (D, D), jnp.float32)).astype(jnp.bfloat16),
        "w1c": (s * jax.random.normal(ks[1], (C, D), jnp.float32)).astype(jnp.bfloat16),
        "b1":  s * jax.random.normal(ks[2], (1, D), jnp.float32),
        "w2":  (s * jax.random.normal(ks[3], (D, D), jnp.float32)).astype(jnp.bfloat16),
        "b2":  s * jax.random.normal(ks[4], (1, D), jnp.float32),
        "w3":  (s * jax.random.normal(ks[5], (D, D), jnp.float32)).astype(jnp.bfloat16),
        "b3":  s * jax.random.normal(ks[6], (1, D), jnp.float32),
        # Conv1d(1, 1, k=3, padding=1): 3 taps + bias (shared over B and D).
        "conv_w": 0.3 * jax.random.normal(ks[7], (kernel_size,), jnp.float32),
        "conv_b": jnp.asarray(0.1, jnp.float32),
        "stdp_factor": jnp.asarray(1.0, jnp.float32),
        "meta_gain": jnp.asarray(1.0, jnp.float32),
    }


if __name__ == "__main__":
    B, T, D, C = 8, 16, 128, 64   # batch, seq, n_embd, context_dim

    key = jax.random.PRNGKey(0)
    kx, kc, kp, kw = jax.random.split(key, 4)
    x = jax.random.normal(kx, (B, T, D), jnp.float32)
    context = jax.random.normal(kc, (B, T, C), jnp.float32)
    prev_activation = jax.random.normal(kp, (B, T, D), jnp.float32)
    params = init_params(kw, D, C)

    # row_tile=64 -> 2 grid steps at this size (exercises tile-boundary FIR
    # masking); production would use the default 512-row tiles.
    out = refined_dynamic_neuromodulator(x, context, prev_activation, params,
                                         row_tile=64)
    out = jax.block_until_ready(out)

    ref = reference_forward(x, context, prev_activation, params)
    assert out.shape == (B, T, D)
    # bf16 matmuls + approx-reciprocal sigmoid vs. f32 reference.
    assert jnp.allclose(out, ref, rtol=2e-2, atol=2e-2), (
        f"max abs err = {jnp.max(jnp.abs(out - ref))}")

    print("KERNEL_OK")
</pallas_src>

<mosaic_0001>
module attributes {stable_mosaic.version = 11 : i64} {
  func.func @neuromod_kernel(%arg0: i32, %arg1: memref<64x128xf32, #tpu.memory_space<vmem>>, %arg2: memref<64x64xf32, #tpu.memory_space<vmem>>, %arg3: memref<64x128xf32, #tpu.memory_space<vmem>>, %arg4: memref<64x1xf32, #tpu.memory_space<vmem>>, %arg5: memref<64x1xf32, #tpu.memory_space<vmem>>, %arg6: memref<128x128xbf16, #tpu.memory_space<vmem>>, %arg7: memref<64x128xbf16, #tpu.memory_space<vmem>>, %arg8: memref<1x128xf32, #tpu.memory_space<vmem>>, %arg9: memref<128x128xbf16, #tpu.memory_space<vmem>>, %arg10: memref<1x128xf32, #tpu.memory_space<vmem>>, %arg11: memref<128x128xbf16, #tpu.memory_space<vmem>>, %arg12: memref<1x128xf32, #tpu.memory_space<vmem>>, %arg13: memref<4xf32, #tpu.memory_space<smem>>, %arg14: memref<64x128xf32, #tpu.memory_space<vmem>>) attributes {dimension_semantics = [#tpu.dimension_semantics<parallel>], iteration_bounds = array<i64: 2>, scalar_prefetch = 0 : i64, scratch_operands = 0 : i64, tpu.core_type = #tpu.core_type<tc>, window_params = [{transform_indices = @transform_0, window_bounds = array<i64: 64, 128>}, {transform_indices = @transform_1, window_bounds = array<i64: 64, 64>}, {transform_indices = @transform_2, window_bounds = array<i64: 64, 128>}, {transform_indices = @transform_3, window_bounds = array<i64: 64, 1>}, {transform_indices = @transform_4, window_bounds = array<i64: 64, 1>}, {pipeline_mode = #tpu.pipeline_mode<synchronous>, transform_indices = @transform_5, window_bounds = array<i64: 128, 128>}, {pipeline_mode = #tpu.pipeline_mode<synchronous>, transform_indices = @transform_6, window_bounds = array<i64: 64, 128>}, {pipeline_mode = #tpu.pipeline_mode<synchronous>, transform_indices = @transform_7, window_bounds = array<i64: 1, 128>}, {pipeline_mode = #tpu.pipeline_mode<synchronous>, transform_indices = @transform_8, window_bounds = array<i64: 128, 128>}, {pipeline_mode = #tpu.pipeline_mode<synchronous>, transform_indices = @transform_9, window_bounds = array<i64: 1, 128>}, {pipeline_mode = #tpu.pipeline_mode<synchronous>, transform_indices = @transform_10, window_bounds = array<i64: 128, 128>}, {pipeline_mode = #tpu.pipeline_mode<synchronous>, transform_indices = @transform_11, window_bounds = array<i64: 1, 128>}, {transform_indices = @transform_12, window_bounds = array<i64: 4>}, {transform_indices = @transform_13, window_bounds = array<i64: 64, 128>}]} {
    %c0 = arith.constant 0 : index
    %c0_0 = arith.constant 0 : index
    %0 = vector.load %arg1[%c0, %c0_0] : memref<64x128xf32, #tpu.memory_space<vmem>>, vector<64x128xf32>
    %1 = arith.truncf %0 : vector<64x128xf32> to vector<64x128xbf16>
    %c0_1 = arith.constant 0 : index
    %c0_2 = arith.constant 0 : index
    %2 = vector.load %arg2[%c0_1, %c0_2] : memref<64x64xf32, #tpu.memory_space<vmem>>, vector<64x64xf32>
    %3 = arith.truncf %2 : vector<64x64xf32> to vector<64x64xbf16>
    %c0_3 = arith.constant 0 : index
    %c0_4 = arith.constant 0 : index
    %4 = vector.load %arg6[%c0_3, %c0_4] : memref<128x128xbf16, #tpu.memory_space<vmem>>, vector<128x128xbf16>
    %cst = arith.constant dense<0.000000e+00> : vector<64x128xf32>
    %5 = tpu.matmul %1, %4, %cst {dimension_numbers = #tpu.dot_dimension_numbers<[1], [0], [0], [1], [0, 0, 1, 1], [], []>} : vector<64x128xbf16>, vector<128x128xbf16>, vector<64x128xf32> -> vector<64x128xf32>
    %c0_5 = arith.constant 0 : index
    %c0_6 = arith.constant 0 : index
    %6 = vector.load %arg7[%c0_5, %c0_6] : memref<64x128xbf16, #tpu.memory_space<vmem>>, vector<64x128xbf16>
    %cst_7 = arith.constant dense<0.000000e+00> : vector<64x128xf32>
    %7 = tpu.matmul %3, %6, %cst_7 {dimension_numbers = #tpu.dot_dimension_numbers<[1], [0], [0], [1], [0, 0, 1, 1], [], []>} : vector<64x64xbf16>, vector<64x128xbf16>, vector<64x128xf32> -> vector<64x128xf32>
    %8 = arith.addf %5, %7 : vector<64x128xf32>
    %c0_8 = arith.constant 0 : index
    %c0_9 = arith.constant 0 : index
    %9 = vector.load %arg8[%c0_8, %c0_9] : memref<1x128xf32, #tpu.memory_space<vmem>>, vector<1x128xf32>
    %10 = vector.broadcast %9 : vector<1x128xf32> to vector<64x128xf32>
    %11 = arith.addf %8, %10 : vector<64x128xf32>
    %cst_10 = arith.constant 0.000000e+00 : f32
    %12 = vector.broadcast %cst_10 : f32 to vector<64x128xf32>
    %13 = arith.subf %12, %11 : vector<64x128xf32>
    %14 = math.exp %13 : vector<64x128xf32>
    %cst_11 = arith.constant 1.000000e+00 : f32
    %15 = vector.broadcast %cst_11 : f32 to vector<64x128xf32>
    %16 = arith.addf %15, %14 : vector<64x128xf32>
    %17 = tpu.reciprocal %16 {approx = true} : vector<64x128xf32> -> vector<64x128xf32>
    %18 = arith.mulf %11, %17 : vector<64x128xf32>
    %19 = arith.truncf %18 : vector<64x128xf32> to vector<64x128xbf16>
    %c0_12 = arith.constant 0 : index
    %c0_13 = arith.constant 0 : index
    %20 = vector.load %arg9[%c0_12, %c0_13] : memref<128x128xbf16, #tpu.memory_space<vmem>>, vector<128x128xbf16>
    %cst_14 = arith.constant dense<0.000000e+00> : vector<64x128xf32>
    %21 = tpu.matmul %19, %20, %cst_14 {dimension_numbers = #tpu.dot_dimension_numbers<[1], [0], [0], [1], [0, 0, 1, 1], [], []>} : vector<64x128xbf16>, vector<128x128xbf16>, vector<64x128xf32> -> vector<64x128xf32>
    %c0_15 = arith.constant 0 : index
    %c0_16 = arith.constant 0 : index
    %22 = vector.load %arg10[%c0_15, %c0_16] : memref<1x128xf32, #tpu.memory_space<vmem>>, vector<1x128xf32>
    %23 = vector.broadcast %22 : vector<1x128xf32> to vector<64x128xf32>
    %24 = arith.addf %21, %23 : vector<64x128xf32>
    %cst_17 = arith.constant 0.000000e+00 : f32
    %25 = vector.broadcast %cst_17 : f32 to vector<64x128xf32>
    %26 = arith.subf %25, %24 : vector<64x128xf32>
    %27 = math.exp %26 : vector<64x128xf32>
    %cst_18 = arith.constant 1.000000e+00 : f32
    %28 = vector.broadcast %cst_18 : f32 to vector<64x128xf32>
    %29 = arith.addf %28, %27 : vector<64x128xf32>
    %30 = tpu.reciprocal %29 {approx = true} : vector<64x128xf32> -> vector<64x128xf32>
    %31 = arith.mulf %24, %30 : vector<64x128xf32>
    %32 = arith.truncf %31 : vector<64x128xf32> to vector<64x128xbf16>
    %c0_19 = arith.constant 0 : index
    %c0_20 = arith.constant 0 : index
    %33 = vector.load %arg11[%c0_19, %c0_20] : memref<128x128xbf16, #tpu.memory_space<vmem>>, vector<128x128xbf16>
    %cst_21 = arith.constant dense<0.000000e+00> : vector<64x128xf32>
    %34 = tpu.matmul %32, %33, %cst_21 {dimension_numbers = #tpu.dot_dimension_numbers<[1], [0], [0], [1], [0, 0, 1, 1], [], []>} : vector<64x128xbf16>, vector<128x128xbf16>, vector<64x128xf32> -> vector<64x128xf32>
    %c0_22 = arith.constant 0 : index
    %c0_23 = arith.constant 0 : index
    %35 = vector.load %arg12[%c0_22, %c0_23] : memref<1x128xf32, #tpu.memory_space<vmem>>, vector<1x128xf32>
    %36 = vector.broadcast %35 : vector<1x128xf32> to vector<64x128xf32>
    %37 = arith.addf %34, %36 : vector<64x128xf32>
    %cst_24 = arith.constant 0.000000e+00 : f32
    %38 = vector.broadcast %cst_24 : f32 to vector<64x128xf32>
    %39 = arith.subf %38, %37 : vector<64x128xf32>
    %40 = math.exp %39 : vector<64x128xf32>
    %cst_25 = arith.constant 1.000000e+00 : f32
    %41 = vector.broadcast %cst_25 : f32 to vector<64x128xf32>
    %42 = arith.addf %41, %40 : vector<64x128xf32>
    %43 = tpu.reciprocal %42 {approx = true} : vector<64x128xf32> -> vector<64x128xf32>
    %c0_26 = arith.constant 0 : index
    %c0_27 = arith.constant 0 : index
    %44 = vector.load %arg1[%c0_26, %c0_27] : memref<64x128xf32, #tpu.memory_space<vmem>>, vector<64x128xf32>
    %c0_28 = arith.constant 0 : index
    %c0_29 = arith.constant 0 : index
    %45 = vector.load %arg3[%c0_28, %c0_29] : memref<64x128xf32, #tpu.memory_space<vmem>>, vector<64x128xf32>
    %46 = arith.subf %44, %45 : vector<64x128xf32>
    %47 = math.absf %46 : vector<64x128xf32>
    %c1_i32 = arith.constant 1 : i32
    %48 = tpu.dynamic_rotate %47 by %c1_i32 dim 0 : vector<64x128xf32>, i32 -> vector<64x128xf32>
    %c0_30 = arith.constant 0 : index
    %c0_31 = arith.constant 0 : index
    %49 = vector.load %arg4[%c0_30, %c0_31] : memref<64x1xf32, #tpu.memory_space<vmem>>, vector<64x1xf32>
    %50 = vector.broadcast %49 : vector<64x1xf32> to vector<64x128xf32>
    %51 = arith.mulf %48, %50 : vector<64x128xf32>
    %c63_i32 = arith.constant 63 : i32
    %52 = tpu.dynamic_rotate %47 by %c63_i32 dim 0 : vector<64x128xf32>, i32 -> vector<64x128xf32>
    %c0_32 = arith.constant 0 : index
    %c0_33 = arith.constant 0 : index
    %53 = vector.load %arg5[%c0_32, %c0_33] : memref<64x1xf32, #tpu.memory_space<vmem>>, vector<64x1xf32>
    %54 = vector.broadcast %53 : vector<64x1xf32> to vector<64x128xf32>
    %55 = arith.mulf %52, %54 : vector<64x128xf32>
    %c0_34 = arith.constant 0 : index
    %56 = memref.load %arg13[%c0_34] : memref<4xf32, #tpu.memory_space<smem>>
    %c1 = arith.constant 1 : index
    %57 = memref.load %arg13[%c1] : memref<4xf32, #tpu.memory_space<smem>>
    %c2 = arith.constant 2 : index
    %58 = memref.load %arg13[%c2] : memref<4xf32, #tpu.memory_space<smem>>
    %c3 = arith.constant 3 : index
    %59 = memref.load %arg13[%c3] : memref<4xf32, #tpu.memory_space<smem>>
    %60 = vector.broadcast %56 : f32 to vector<64x128xf32>
    %61 = arith.mulf %60, %51 : vector<64x128xf32>
    %62 = vector.broadcast %57 : f32 to vector<64x128xf32>
    %63 = arith.mulf %62, %47 : vector<64x128xf32>
    %64 = arith.addf %61, %63 : vector<64x128xf32>
    %65 = vector.broadcast %58 : f32 to vector<64x128xf32>
    %66 = arith.mulf %65, %55 : vector<64x128xf32>
    %67 = arith.addf %64, %66 : vector<64x128xf32>
    %cst_35 = arith.constant 0.000000e+00 : f32
    %68 = vector.broadcast %cst_35 : f32 to vector<64x128xf32>
    %69 = arith.subf %68, %67 : vector<64x128xf32>
    %70 = math.exp %69 : vector<64x128xf32>
    %71 = arith.mulf %43, %70 : vector<64x128xf32>
    %72 = vector.broadcast %59 : f32 to vector<64x128xf32>
    %73 = arith.mulf %71, %72 : vector<64x128xf32>
    %c0_36 = arith.constant 0 : index
    %c0_37 = arith.constant 0 : index
    %74 = vector.load %arg14[%c0_36, %c0_37] : memref<64x128xf32, #tpu.memory_space<vmem>>, vector<64x128xf32>
    tpu.vector_store %arg14[%c0_36, %c0_37], %73 {strides = array<i32>} : memref<64x128xf32, #tpu.memory_space<vmem>>, vector<64x128xf32>,
    return
  }
  func.func @transform_0(%arg0: i32) -> (i32, i32) {
    %c0_i32 = arith.constant 0 : i32
    %c0_i32_0 = arith.constant 0 : i32
    return %arg0, %c0_i32 : i32, i32
  }
  func.func @transform_1(%arg0: i32) -> (i32, i32) {
    %c0_i32 = arith.constant 0 : i32
    %c0_i32_0 = arith.constant 0 : i32
    return %arg0, %c0_i32 : i32, i32
  }
  func.func @transform_2(%arg0: i32) -> (i32, i32) {
    %c0_i32 = arith.constant 0 : i32
    %c0_i32_0 = arith.constant 0 : i32
    return %arg0, %c0_i32 : i32, i32
  }
  func.func @transform_3(%arg0: i32) -> (i32, i32) {
    %c0_i32 = arith.constant 0 : i32
    %c0_i32_0 = arith.constant 0 : i32
    return %arg0, %c0_i32 : i32, i32
  }
  func.func @transform_4(%arg0: i32) -> (i32, i32) {
    %c0_i32 = arith.constant 0 : i32
    %c0_i32_0 = arith.constant 0 : i32
    return %arg0, %c0_i32 : i32, i32
  }
  func.func @transform_5(%arg0: i32) -> (i32, i32) {
    %c0_i32 = arith.constant 0 : i32
    %c0_i32_0 = arith.constant 0 : i32
    %c0_i32_1 = arith.constant 0 : i32
    return %c0_i32, %c0_i32_0 : i32, i32
  }
  func.func @transform_6(%arg0: i32) -> (i32, i32) {
    %c0_i32 = arith.constant 0 : i32
    %c0_i32_0 = arith.constant 0 : i32
    %c0_i32_1 = arith.constant 0 : i32
    return %c0_i32, %c0_i32_0 : i32, i32
  }
  func.func @transform_7(%arg0: i32) -> (i32, i32) {
    %c0_i32 = arith.constant 0 : i32
    %c0_i32_0 = arith.constant 0 : i32
    %c0_i32_1 = arith.constant 0 : i32
    return %c0_i32, %c0_i32_0 : i32, i32
  }
  func.func @transform_8(%arg0: i32) -> (i32, i32) {
    %c0_i32 = arith.constant 0 : i32
    %c0_i32_0 = arith.constant 0 : i32
    %c0_i32_1 = arith.constant 0 : i32
    return %c0_i32, %c0_i32_0 : i32, i32
  }
  func.func @transform_9(%arg0: i32) -> (i32, i32) {
    %c0_i32 = arith.constant 0 : i32
    %c0_i32_0 = arith.constant 0 : i32
    %c0_i32_1 = arith.constant 0 : i32
    return %c0_i32, %c0_i32_0 : i32, i32
  }
  func.func @transform_10(%arg0: i32) -> (i32, i32) {
    %c0_i32 = arith.constant 0 : i32
    %c0_i32_0 = arith.constant 0 : i32
    %c0_i32_1 = arith.constant 0 : i32
    return %c0_i32, %c0_i32_0 : i32, i32
  }
  func.func @transform_11(%arg0: i32) -> (i32, i32) {
    %c0_i32 = arith.constant 0 : i32
    %c0_i32_0 = arith.constant 0 : i32
    %c0_i32_1 = arith.constant 0 : i32
    return %c0_i32, %c0_i32_0 : i32, i32
  }
  func.func @transform_12(%arg0: i32) -> i32 {
    %c0_i32 = arith.constant 0 : i32
    %c0_i32_0 = arith.constant 0 : i32
    return %c0_i32 : i32
  }
  func.func @transform_13(%arg0: i32) -> (i32, i32) {
    %c0_i32 = arith.constant 0 : i32
    %c0_i32_0 = arith.constant 0 : i32
    return %arg0, %c0_i32 : i32, i32
  }
}

</mosaic_0001>

<llo_original>
// kernel: tpu_custom_call.1
$region0: #{tpu_custom_call.1}
  #allocation0 [shape = 'u32[]', space=smem, size = 0x4, offset = 0x4, fixed_abs, tag = 'smem constant byte address 0x4 - core index']
  #allocation1 [shape = 'u32[144,128]{1,0:T(1,128)}', space=vmem, size = 0x12000, scoped, tag = 'internal scratch']
  %s0 = inlined_call_operand.vmem [shape: f32[128,128], index: 0, kind: input, shape index: {}]
  %s1 = inlined_call_operand.vmem [shape: f32[128,64], index: 1, kind: input, shape index: {}]
  %s2 = inlined_call_operand.vmem [shape: f32[128,128], index: 2, kind: input, shape index: {}]
  %s3 = inlined_call_operand.vmem [shape: f32[128,1], index: 3, kind: input, shape index: {}]
  %s4 = inlined_call_operand.vmem [shape: f32[128,1], index: 4, kind: input, shape index: {}]
  %s5 = inlined_call_operand.vmem [shape: bf16[128,128], index: 5, kind: input, shape index: {}]
  %s6 = inlined_call_operand.hbm [shape: bf16[64,128], index: 6, kind: input, shape index: {}]
  %s7 = inlined_call_operand.vmem [shape: f32[1,128], index: 7, kind: input, shape index: {}]
  %s8 = inlined_call_operand.vmem [shape: bf16[128,128], index: 8, kind: input, shape index: {}]
  %s9 = inlined_call_operand.vmem [shape: f32[1,128], index: 9, kind: input, shape index: {}]
  %s10 = inlined_call_operand.vmem [shape: bf16[128,128], index: 10, kind: input, shape index: {}]
  %s11 = inlined_call_operand.vmem [shape: f32[1,128], index: 11, kind: input, shape index: {}]
  %s12 = inlined_call_operand.vmem [shape: f32[4], index: 12, kind: input, shape index: {}]
  %s13 = inlined_call_operand.hbm [shape: f32[128,128], index: 13, kind: output, shape index: {}]
  %s14 = sld [smem:[#allocation0]]
  $region93: #{tpu_custom_call.1} parent=0
    _
  %s16 = ssub.s32 1, %s14
  %s17 = scalar_select 0, %s16, %s14
  $region1: #{tpu_custom_call.1} parent=0
    #allocation2 [shape = 'u8[16384]{0}', space=vmem, size = 0x4000, scoped, tag = 'input window, operand 6, single buffered']
    #allocation3 [shape = 's32[2]{0}', space=sflag, size = 0x8, scoped, tag = 'scoped memory for tpu_custom_call.1']
    #allocation4 [shape = 's32[2]{0}', space=sflag, size = 0x8, scoped, tag = 'scoped memory for tpu_custom_call.1']
    #allocation5 [shape = 's32[2]{0}', space=sflag, size = 0x8, scoped, tag = 'scoped memory for tpu_custom_call.1']
    #allocation6 [shape = 'u8[512]{0}', space=smem, size = 0x200, scoped, tag = 'input window, operand 12, single buffered']
    #allocation7 [shape = 'u8[65536]{0}', space=vmem, size = 0x10000, scoped, tag = 'output window, operand 0']
    %18 = vsyncpa [#allocation3], 0
    %19 = vsyncpa [#allocation5], 0
    %20 = vsyncpa [#allocation4], 0
    %s21 = scalar_lea.sflag [#allocation4], 1
    %22 = vsyncpa %s21, 0
    loop: start=0, step=1, limit=4
    $region2: #{tpu_custom_call.1} parent=1 // loop_pre_header
      _
    $region3: #{tpu_custom_call.1} parent=1 // loop_header
      %s24 = sphi 0, %s28
      %p25 = scmp.ge.s32.totalorder %s24, 4
      %s34 = sphi 0, %s36
      %s37 = sphi 0, %s34
      %s38 = sphi 0, %s37
      %s54 = sphi 0, %s38
      %s60 = sphi 0, %s62
      %s63 = sphi 0, %s60
      %s64 = sphi 0, %s63
      %s80 = sphi 0, %s64
      %s86 = sphi 0, %s88
      %s89 = sphi 0, %s86
      %s90 = sphi 0, %s89
      %s106 = sphi 0, %s90
      %s112 = sphi 0, %s114
      %s115 = sphi 0, %s112
      %s116 = sphi 0, %s115
      %s132 = sphi 0, %s116
      %s138 = sphi 0, %s140
      %s141 = sphi 0, %s138
      %s142 = sphi 0, %s141
      %s158 = sphi 0, %s142
      %s162 = sphi 0, %s162
      %s164 = sphi 0, %s162
      %s165 = sphi 0, %s164
      %s179 = sphi 0, %s165
      %s183 = sphi 0, %s183
      %s185 = sphi 0, %s183
      %s186 = sphi 0, %s185
      %s200 = sphi 0, %s186
      %s204 = sphi 0, %s204
      %s206 = sphi 0, %s204
      %s207 = sphi 0, %s206
      %s221 = sphi 0, %s207
      %s225 = sphi 0, %s225
      %s227 = sphi 0, %s225
      %s228 = sphi 0, %s227
      %s242 = sphi 0, %s228
      %s246 = sphi 0, %s246
      %s248 = sphi 0, %s246
      %s249 = sphi 0, %s248
      %s263 = sphi 0, %s249
      %s267 = sphi 0, %s267
      %s269 = sphi 0, %s267
      %s270 = sphi 0, %s269
      %s284 = sphi 0, %s270
      %s288 = sphi 0, %s288
      %s290 = sphi 0, %s288
      %s291 = sphi 0, %s290
      %s305 = sphi 0, %s291
      %s309 = sphi 0, %s309
      %s311 = sphi 0, %s309
      %s312 = sphi 0, %s311
      %s326 = sphi 0, %s312
      %s332 = sphi 0, %s334
      %s335 = sphi 0, %s332
      %s336 = sphi 0, %s335
      %s352 = sphi 0, %s336
    $region4: #{tpu_custom_call.1} parent=1 // loop_header_branch
      %27 = sbr.rel (%p25) target = $region8
    $region5: #{tpu_custom_call.1} parent=1 // loop_body
      %s29 = ssub.s32 %s24, 1
      %s30 = ssub.s32 %s24, 2
      %s31 = sadd.s32 %s24, 1
      %s32 = ssub.s32 %s24, %s31
      %p33 = scmp.eq.s32.totalorder %s32, 0
      %s35 = sadd.s32 %s34, 1
      %s36 = scalar_select %p33, %s34, %s35
      %p39 = pneg %p33
      %p40 = scmp.eq.s32.totalorder %s24, 1
      %p41 = por %p39, %p40
      %p42 = scmp.ne.s32.totalorder %s34, %s37
      %p43 = scmp.eq.s32.totalorder %s24, 0
      %p44 = por %p42, %p43
      %p45 = scmp.ne.s32.totalorder %s34, %s37
      %p46 = scmp.eq.s32.totalorder %s29, 1
      %p47 = por %p45, %p46
      %p48 = scmp.ne.s32.totalorder %s37, %s38
      %p49 = scmp.eq.s32.totalorder %s29, 0
      %p50 = por %p48, %p49
      %p51 = scmp.ne.s32.totalorder %s37, %s38
      %p52 = scmp.eq.s32.totalorder %s30, 1
      %p53 = por %p51, %p52
      %p55 = scmp.ne.s32.totalorder %s38, %s54
      %p56 = scmp.eq.s32.totalorder %s30, 0
      %p57 = por %p55, %p56
      %s58 = ssub.s32 %s24, %s31
      %p59 = scmp.eq.s32.totalorder %s58, 0
      %s61 = sadd.s32 %s60, 1
      %s62 = scalar_select %p59, %s60, %s61
      %p65 = pneg %p59
      %p66 = scmp.eq.s32.totalorder %s24, 1
      %p67 = por %p65, %p66
      %p68 = scmp.ne.s32.totalorder %s60, %s63
      %p69 = scmp.eq.s32.totalorder %s24, 0
      %p70 = por %p68, %p69
      %p71 = scmp.ne.s32.totalorder %s60, %s63
      %p72 = scmp.eq.s32.totalorder %s29, 1
      %p73 = por %p71, %p72
      %p74 = scmp.ne.s32.totalorder %s63, %s64
      %p75 = scmp.eq.s32.totalorder %s29, 0
      %p76 = por %p74, %p75
      %p77 = scmp.ne.s32.totalorder %s63, %s64
      %p78 = scmp.eq.s32.totalorder %s30, 1
      %p79 = por %p77, %p78
      %p81 = scmp.ne.s32.totalorder %s64, %s80
      %p82 = scmp.eq.s32.totalorder %s30, 0
      %p83 = por %p81, %p82
      %s84 = ssub.s32 %s24, %s31
      %p85 = scmp.eq.s32.totalorder %s84, 0
      %s87 = sadd.s32 %s86, 1
      %s88 = scalar_select %p85, %s86, %s87
      %p91 = pneg %p85
      %p92 = scmp.eq.s32.totalorder %s24, 1
      %p93 = por %p91, %p92
      %p94 = scmp.ne.s32.totalorder %s86, %s89
      %p95 = scmp.eq.s32.totalorder %s24, 0
      %p96 = por %p94, %p95
      %p97 = scmp.ne.s32.totalorder %s86, %s89
      %p98 = scmp.eq.s32.totalorder %s29, 1
      %p99 = por %p97, %p98
      %p100 = scmp.ne.s32.totalorder %s89, %s90
      %p101 = scmp.eq.s32.totalorder %s29, 0
      %p102 = por %p100, %p101
      %p103 = scmp.ne.s32.totalorder %s89, %s90
      %p104 = scmp.eq.s32.totalorder %s30, 1
      %p105 = por %p103, %p104
      %p107 = scmp.ne.s32.totalorder %s90, %s106
      %p108 = scmp.eq.s32.totalorder %s30, 0
      %p109 = por %p107, %p108
      %s110 = ssub.s32 %s24, %s31
      %p111 = scmp.eq.s32.totalorder %s110, 0
      %s113 = sadd.s32 %s112, 1
      %s114 = scalar_select %p111, %s112, %s113
      %p117 = pneg %p111
      %p118 = scmp.eq.s32.totalorder %s24, 1
      %p119 = por %p117, %p118
      %p120 = scmp.ne.s32.totalorder %s112, %s115
      %p121 = scmp.eq.s32.totalorder %s24, 0
      %p122 = por %p120, %p121
      %p123 = scmp.ne.s32.totalorder %s112, %s115
      %p124 = scmp.eq.s32.totalorder %s29, 1
      %p125 = por %p123, %p124
      %p126 = scmp.ne.s32.totalorder %s115, %s116
      %p127 = scmp.eq.s32.totalorder %s29, 0
      %p128 = por %p126, %p127
      %p129 = scmp.ne.s32.totalorder %s115, %s116
      %p130 = scmp.eq.s32.totalorder %s30, 1
      %p131 = por %p129, %p130
      %p133 = scmp.ne.s32.totalorder %s116, %s132
      %p134 = scmp.eq.s32.totalorder %s30, 0
      %p135 = por %p133, %p134
      %s136 = ssub.s32 %s24, %s31
      %p137 = scmp.eq.s32.totalorder %s136, 0
      %s139 = sadd.s32 %s138, 1
      %s140 = scalar_select %p137, %s138, %s139
      %p143 = pneg %p137
      %p144 = scmp.eq.s32.totalorder %s24, 1
      %p145 = por %p143, %p144
      %p146 = scmp.ne.s32.totalorder %s138, %s141
      %p147 = scmp.eq.s32.totalorder %s24, 0
      %p148 = por %p146, %p147
      %p149 = scmp.ne.s32.totalorder %s138, %s141
      %p150 = scmp.eq.s32.totalorder %s29, 1
      %p151 = por %p149, %p150
      %p152 = scmp.ne.s32.totalorder %s141, %s142
      %p153 = scmp.eq.s32.totalorder %s29, 0
      %p154 = por %p152, %p153
      %p155 = scmp.ne.s32.totalorder %s141, %s142
      %p156 = scmp.eq.s32.totalorder %s30, 1
      %p157 = por %p155, %p156
      %p159 = scmp.ne.s32.totalorder %s142, %s158
      %p160 = scmp.eq.s32.totalorder %s30, 0
      %p161 = por %p159, %p160
      %s163 = sadd.s32 %s162, 1
      %p166 = scmp.eq.s32.totalorder %s24, 1
      %p167 = scmp.ne.s32.totalorder %s162, %s164
      %p168 = scmp.eq.s32.totalorder %s24, 0
      %p169 = por %p167, %p168
      %p170 = scmp.ne.s32.totalorder %s162, %s164
      %p171 = scmp.eq.s32.totalorder %s29, 1
      %p172 = por %p170, %p171
      %p173 = scmp.ne.s32.totalorder %s164, %s165
      %p174 = scmp.eq.s32.totalorder %s29, 0
      %p175 = por %p173, %p174
      %p176 = scmp.ne.s32.totalorder %s164, %s165
      %p177 = scmp.eq.s32.totalorder %s30, 1
      %p178 = por %p176, %p177
      %p180 = scmp.ne.s32.totalorder %s165, %s179
      %p181 = scmp.eq.s32.totalorder %s30, 0
      %p182 = por %p180, %p181
      %s184 = sadd.s32 %s183, 1
      %p187 = scmp.eq.s32.totalorder %s24, 1
      %p188 = scmp.ne.s32.totalorder %s183, %s185
      %p189 = scmp.eq.s32.totalorder %s24, 0
      %p190 = por %p188, %p189
      %p191 = scmp.ne.s32.totalorder %s183, %s185
      %p192 = scmp.eq.s32.totalorder %s29, 1
      %p193 = por %p191, %p192
      %p194 = scmp.ne.s32.totalorder %s185, %s186
      %p195 = scmp.eq.s32.totalorder %s29, 0
      %p196 = por %p194, %p195
      %p197 = scmp.ne.s32.totalorder %s185, %s186
      %p198 = scmp.eq.s32.totalorder %s30, 1
      %p199 = por %p197, %p198
      %p201 = scmp.ne.s32.totalorder %s186, %s200
      %p202 = scmp.eq.s32.totalorder %s30, 0
      %p203 = por %p201, %p202
      %s205 = sadd.s32 %s204, 1
      %p208 = scmp.eq.s32.totalorder %s24, 1
      %p209 = scmp.ne.s32.totalorder %s204, %s206
      %p210 = scmp.eq.s32.totalorder %s24, 0
      %p211 = por %p209, %p210
      %p212 = scmp.ne.s32.totalorder %s204, %s206
      %p213 = scmp.eq.s32.totalorder %s29, 1
      %p214 = por %p212, %p213
      %p215 = scmp.ne.s32.totalorder %s206, %s207
      %p216 = scmp.eq.s32.totalorder %s29, 0
      %p217 = por %p215, %p216
      %p218 = scmp.ne.s32.totalorder %s206, %s207
      %p219 = scmp.eq.s32.totalorder %s30, 1
      %p220 = por %p218, %p219
      %p222 = scmp.ne.s32.totalorder %s207, %s221
      %p223 = scmp.eq.s32.totalorder %s30, 0
      %p224 = por %p222, %p223
      %s226 = sadd.s32 %s225, 1
      %p229 = scmp.eq.s32.totalorder %s24, 1
      %p230 = scmp.ne.s32.totalorder %s225, %s227
      %p231 = scmp.eq.s32.totalorder %s24, 0
      %p232 = por %p230, %p231
      %p233 = scmp.ne.s32.totalorder %s225, %s227
      %p234 = scmp.eq.s32.totalorder %s29, 1
      %p235 = por %p233, %p234
      %p236 = scmp.ne.s32.totalorder %s227, %s228
      %p237 = scmp.eq.s32.totalorder %s29, 0
      %p238 = por %p236, %p237
      %p239 = scmp.ne.s32.totalorder %s227, %s228
      %p240 = scmp.eq.s32.totalorder %s30, 1
      %p241 = por %p239, %p240
      %p243 = scmp.ne.s32.totalorder %s228, %s242
      %p244 = scmp.eq.s32.totalorder %s30, 0
      %p245 = por %p243, %p244
      %s247 = sadd.s32 %s246, 1
      %p250 = scmp.eq.s32.totalorder %s24, 1
      %p251 = scmp.ne.s32.totalorder %s246, %s248
      %p252 = scmp.eq.s32.totalorder %s24, 0
      %p253 = por %p251, %p252
      %p254 = scmp.ne.s32.totalorder %s246, %s248
      %p255 = scmp.eq.s32.totalorder %s29, 1
      %p256 = por %p254, %p255
      %p257 = scmp.ne.s32.totalorder %s248, %s249
      %p258 = scmp.eq.s32.totalorder %s29, 0
      %p259 = por %p257, %p258
      %p260 = scmp.ne.s32.totalorder %s248, %s249
      %p261 = scmp.eq.s32.totalorder %s30, 1
      %p262 = por %p260, %p261
      %p264 = scmp.ne.s32.totalorder %s249, %s263
      %p265 = scmp.eq.s32.totalorder %s30, 0
      %p266 = por %p264, %p265
      %s268 = sadd.s32 %s267, 1
      %p271 = scmp.eq.s32.totalorder %s24, 1
      %p272 = scmp.ne.s32.totalorder %s267, %s269
      %p273 = scmp.eq.s32.totalorder %s24, 0
      %p274 = por %p272, %p273
      %p275 = scmp.ne.s32.totalorder %s267, %s269
      %p276 = scmp.eq.s32.totalorder %s29, 1
      %p277 = por %p275, %p276
      %p278 = scmp.ne.s32.totalorder %s269, %s270
      %p279 = scmp.eq.s32.totalorder %s29, 0
      %p280 = por %p278, %p279
      %p281 = scmp.ne.s32.totalorder %s269, %s270
      %p282 = scmp.eq.s32.totalorder %s30, 1
      %p283 = por %p281, %p282
      %p285 = scmp.ne.s32.totalorder %s270, %s284
      %p286 = scmp.eq.s32.totalorder %s30, 0
      %p287 = por %p285, %p286
      %s289 = sadd.s32 %s288, 1
      %p292 = scmp.eq.s32.totalorder %s24, 1
      %p293 = scmp.ne.s32.totalorder %s288, %s290
      %p294 = scmp.eq.s32.totalorder %s24, 0
      %p295 = por %p293, %p294
      %p296 = scmp.ne.s32.totalorder %s288, %s290
      %p297 = scmp.eq.s32.totalorder %s29, 1
      %p298 = por %p296, %p297
      %p299 = scmp.ne.s32.totalorder %s290, %s291
      %p300 = scmp.eq.s32.totalorder %s29, 0
      %p301 = por %p299, %p300
      %p302 = scmp.ne.s32.totalorder %s290, %s291
      %p303 = scmp.eq.s32.totalorder %s30, 1
      %p304 = por %p302, %p303
      %p306 = scmp.ne.s32.totalorder %s291, %s305
      %p307 = scmp.eq.s32.totalorder %s30, 0
      %p308 = por %p306, %p307
      %s310 = sadd.s32 %s309, 1
      %p313 = scmp.eq.s32.totalorder %s24, 1
      %p314 = scmp.ne.s32.totalorder %s309, %s311
      %p315 = scmp.eq.s32.totalorder %s24, 0
      %p316 = por %p314, %p315
      %p317 = scmp.ne.s32.totalorder %s309, %s311
      %p318 = scmp.eq.s32.totalorder %s29, 1
      %p319 = por %p317, %p318
      %p320 = scmp.ne.s32.totalorder %s311, %s312
      %p321 = scmp.eq.s32.totalorder %s29, 0
      %p322 = por %p320, %p321
      %p323 = scmp.ne.s32.totalorder %s311, %s312
      %p324 = scmp.eq.s32.totalorder %s30, 1
      %p325 = por %p323, %p324
      %p327 = scmp.ne.s32.totalorder %s312, %s326
      %p328 = scmp.eq.s32.totalorder %s30, 0
      %p329 = por %p327, %p328
      %s330 = ssub.s32 %s24, %s31
      %p331 = scmp.eq.s32.totalorder %s330, 0
      %s333 = sadd.s32 %s332, 1
      %s334 = scalar_select %p331, %s332, %s333
      %p337 = pneg %p331
      %p338 = scmp.eq.s32.totalorder %s24, 1
      %p339 = por %p337, %p338
      %p340 = scmp.ne.s32.totalorder %s332, %s335
      %p341 = scmp.eq.s32.totalorder %s24, 0
      %p342 = por %p340, %p341
      %p343 = scmp.ne.s32.totalorder %s332, %s335
      %p344 = scmp.eq.s32.totalorder %s29, 1
      %p345 = por %p343, %p344
      %p346 = scmp.ne.s32.totalorder %s335, %s336
      %p347 = scmp.eq.s32.totalorder %s29, 0
      %p348 = por %p346, %p347
      %p349 = scmp.ne.s32.totalorder %s335, %s336
      %p350 = scmp.eq.s32.totalorder %s30, 1
      %p351 = por %p349, %p350
      %p353 = scmp.ne.s32.totalorder %s336, %s352
      %p354 = scmp.eq.s32.totalorder %s30, 0
      %p355 = por %p353, %p354
      %p356 = scmp.le.s32.totalorder 1, %s24
      %p357 = scmp.lt.s32.totalorder %s24, 3
      %p358 = pnand %p356, %p357
      %p359 = pneg %p358
      // Predicated region
      $region9: #{tpu_custom_call.1} parent=5 // pred_check
        _
      $region10: #{tpu_custom_call.1} parent=5 // pred_check_branch
        %361 = sbr.rel (%p358) target = $region12
      $region11: #{tpu_custom_call.1} parent=5 // pred_region
        %s362 = ssub.s32 %s24, 1
        // Predicated region
        $region13: #{tpu_custom_call.1} parent=11 // pred_check
          %p363 = pneg %p175
        $region14: #{tpu_custom_call.1} parent=11 // pred_check_branch
          %365 = sbr.rel (%p363) target = $region16
        $region15: #{tpu_custom_call.1} parent=11 // pred_region
          _
        $region16: #{tpu_custom_call.1} parent=11 // pred_fallthru
          _
        // Predicated region
        $region17: #{tpu_custom_call.1} parent=11 // pred_check
          %p366 = pneg %p196
        $region18: #{tpu_custom_call.1} parent=11 // pred_check_branch
          %368 = sbr.rel (%p366) target = $region20
        $region19: #{tpu_custom_call.1} parent=11 // pred_region
          %s370 = ssub.s32 512, 512
          %371 = vsyncadd [#allocation3], %s370
          %s372 = sshll.u32 [#allocation2], 4
          %s373 = int_to_ptr.vmem [resolvable:$true] %s372
          %378 = dma.hbm_to_vmem [thread:$0]  %s6, 512, %s373, [#allocation3], 64, 64, 4
        $region20: #{tpu_custom_call.1} parent=11 // pred_fallthru
          _
        // Predicated region
        $region21: #{tpu_custom_call.1} parent=11 // pred_check
          %p379 = pneg %p217
        $region22: #{tpu_custom_call.1} parent=11 // pred_check_branch
          %381 = sbr.rel (%p379) target = $region24
        $region23: #{tpu_custom_call.1} parent=11 // pred_region
          _
        $region24: #{tpu_custom_call.1} parent=11 // pred_fallthru
          _
        // Predicated region
        $region25: #{tpu_custom_call.1} parent=11 // pred_check
          %p382 = pneg %p238
        $region26: #{tpu_custom_call.1} parent=11 // pred_check_branch
          %384 = sbr.rel (%p382) target = $region28
        $region27: #{tpu_custom_call.1} parent=11 // pred_region
          _
        $region28: #{tpu_custom_call.1} parent=11 // pred_fallthru
          _
        // Predicated region
        $region29: #{tpu_custom_call.1} parent=11 // pred_check
          %p385 = pneg %p259
        $region30: #{tpu_custom_call.1} parent=11 // pred_check_branch
          %387 = sbr.rel (%p385) target = $region32
        $region31: #{tpu_custom_call.1} parent=11 // pred_region
          _
        $region32: #{tpu_custom_call.1} parent=11 // pred_fallthru
          _
        // Predicated region
        $region33: #{tpu_custom_call.1} parent=11 // pred_check
          %p388 = pneg %p280
        $region34: #{tpu_custom_call.1} parent=11 // pred_check_branch
          %390 = sbr.rel (%p388) target = $region36
        $region35: #{tpu_custom_call.1} parent=11 // pred_region
          _
        $region36: #{tpu_custom_call.1} parent=11 // pred_fallthru
          _
        // Predicated region
        $region37: #{tpu_custom_call.1} parent=11 // pred_check
          %p391 = pneg %p301
        $region38: #{tpu_custom_call.1} parent=11 // pred_check_branch
          %393 = sbr.rel (%p391) target = $region40
        $region39: #{tpu_custom_call.1} parent=11 // pred_region
          _
        $region40: #{tpu_custom_call.1} parent=11 // pred_fallthru
          _
        // Predicated region
        $region41: #{tpu_custom_call.1} parent=11 // pred_check
          %p394 = pneg %p322
        $region42: #{tpu_custom_call.1} parent=11 // pred_check_branch
          %396 = sbr.rel (%p394) target = $region44
        $region43: #{tpu_custom_call.1} parent=11 // pred_region
          %s398 = ssub.s32 16, 16
          %399 = vsyncadd [#allocation5], %s398
          %s401 = sshll.u32 %s12, 4
          %s402 = int_to_ptr.vmem [resolvable:$true] %s401
          %404 = dma.vmem_to_smem %s402, 16, [#allocation6], [#allocation5]
        $region44: #{tpu_custom_call.1} parent=11 // pred_fallthru
          _
      $region12: #{tpu_custom_call.1} parent=5 // pred_fallthru
        _
      %p405 = scmp.lt.s32.totalorder %s24, 2
      // Predicated region
      $region45: #{tpu_custom_call.1} parent=5 // pred_check
        %p406 = pneg %p405
      $region46: #{tpu_custom_call.1} parent=5 // pred_check_branch
        %408 = sbr.rel (%p406) target = $region48
      $region47: #{tpu_custom_call.1} parent=5 // pred_region
        // Predicated region
        $region49: #{tpu_custom_call.1} parent=47 // pred_check
          %p409 = pneg %p44
        $region50: #{tpu_custom_call.1} parent=47 // pred_check_branch
          %411 = sbr.rel (%p409) target = $region52
        $region51: #{tpu_custom_call.1} parent=47 // pred_region
          %s412 = smul.u32 8, %s24
          %p413 = scmp.lt.s32.totalorder %s412, 15
          %s414 = scalar_select %p413, %s412, 15
          %s415 = smul.addr %s414, 8
          %s416 = scalar_lea.vmem %s0, %s415
          %s417 = smul.u32 8, %s24
        $region52: #{tpu_custom_call.1} parent=47 // pred_fallthru
          _
        // Predicated region
        $region53: #{tpu_custom_call.1} parent=47 // pred_check
          %p418 = pneg %p70
        $region54: #{tpu_custom_call.1} parent=47 // pred_check_branch
          %420 = sbr.rel (%p418) target = $region56
        $region55: #{tpu_custom_call.1} parent=47 // pred_region
          %s421 = smul.u32 8, %s24
          %p422 = scmp.lt.s32.totalorder %s421, 15
          %s423 = scalar_select %p422, %s421, 15
          %s424 = smul.addr %s423, 8
          %s425 = scalar_lea.vmem %s1, %s424
          %s426 = smul.u32 8, %s24
        $region56: #{tpu_custom_call.1} parent=47 // pred_fallthru
          _
        // Predicated region
        $region57: #{tpu_custom_call.1} parent=47 // pred_check
          %p427 = pneg %p96
        $region58: #{tpu_custom_call.1} parent=47 // pred_check_branch
          %429 = sbr.rel (%p427) target = $region60
        $region59: #{tpu_custom_call.1} parent=47 // pred_region
          %s430 = smul.u32 8, %s24
          %p431 = scmp.lt.s32.totalorder %s430, 15
          %s432 = scalar_select %p431, %s430, 15
          %s433 = smul.addr %s432, 8
          %s434 = scalar_lea.vmem %s2, %s433
          %s435 = smul.u32 8, %s24
        $region60: #{tpu_custom_call.1} parent=47 // pred_fallthru
          _
        // Predicated region
        $region61: #{tpu_custom_call.1} parent=47 // pred_check
          %p436 = pneg %p122
        $region62: #{tpu_custom_call.1} parent=47 // pred_check_branch
          %438 = sbr.rel (%p436) target = $region64
        $region63: #{tpu_custom_call.1} parent=47 // pred_region
          %s439 = smul.u32 8, %s24
          %p440 = scmp.lt.s32.totalorder %s439, 15
          %s441 = scalar_select %p440, %s439, 15
          %s442 = smul.addr %s441, 8
          %s443 = scalar_lea.vmem %s3, %s442
          %s444 = smul.u32 8, %s24
        $region64: #{tpu_custom_call.1} parent=47 // pred_fallthru
          _
        // Predicated region
        $region65: #{tpu_custom_call.1} parent=47 // pred_check
          %p445 = pneg %p148
        $region66: #{tpu_custom_call.1} parent=47 // pred_check_branch
          %447 = sbr.rel (%p445) target = $region68
        $region67: #{tpu_custom_call.1} parent=47 // pred_region
          %s448 = smul.u32 8, %s24
          %p449 = scmp.lt.s32.totalorder %s448, 15
          %s450 = scalar_select %p449, %s448, 15
          %s451 = smul.addr %s450, 8
          %s452 = scalar_lea.vmem %s4, %s451
          %s453 = smul.u32 8, %s24
        $region68: #{tpu_custom_call.1} parent=47 // pred_fallthru
          _
      $region48: #{tpu_custom_call.1} parent=5 // pred_fallthru
        _
      %p454 = scmp.le.s32.totalorder 1, %s24
      %p455 = scmp.lt.s32.totalorder %s24, 3
      %p456 = pnand %p454, %p455
      %p457 = pneg %p456
      // Predicated region
      $region69: #{tpu_custom_call.1} parent=5 // pred_check
        _
      $region70: #{tpu_custom_call.1} parent=5 // pred_check_branch
        %459 = sbr.rel (%p456) target = $region72
      $region71: #{tpu_custom_call.1} parent=5 // pred_region
        %s460 = ssub.s32 %s24, 1
        // Predicated region
        $region73: #{tpu_custom_call.1} parent=71 // pred_check
          %p461 = pneg %p196
        $region74: #{tpu_custom_call.1} parent=71 // pred_check_branch
          %463 = sbr.rel (%p461) target = $region76
        $region75: #{tpu_custom_call.1} parent=71 // pred_region
          %464 = dma.done [#allocation3], 512
        $region76: #{tpu_custom_call.1} parent=71 // pred_fallthru
          _
        // Predicated region
        $region77: #{tpu_custom_call.1} parent=71 // pred_check
          %p465 = pneg %p322
        $region78: #{tpu_custom_call.1} parent=71 // pred_check_branch
          %467 = sbr.rel (%p465) target = $region80
        $region79: #{tpu_custom_call.1} parent=71 // pred_region
          %468 = dma.done [#allocation5], 16
        $region80: #{tpu_custom_call.1} parent=71 // pred_fallthru
          _
        %469 = sfence
        %s470 = smul.u32 8, %s29
        %p471 = scmp.lt.s32.totalorder %s470, 15
        %s472 = scalar_select %p471, %s470, 15
        %s473 = smul.addr %s472, 8
        %s474 = scalar_lea.vmem %s0, %s473
        %p475 = pneg %p50
        %p476 = pneg %p47
        %s477 = smul.u32 8, %s29
        %p478 = scmp.lt.s32.totalorder %s477, 15
        %s479 = scalar_select %p478, %s477, 15
        %s480 = smul.addr %s479, 8
        %s481 = scalar_lea.vmem %s1, %s480
        %p482 = pneg %p76
        %p483 = pneg %p73
        %s484 = smul.u32 8, %s29
        %p485 = scmp.lt.s32.totalorder %s484, 15
        %s486 = scalar_select %p485, %s484, 15
        %s487 = smul.addr %s486, 8
        %s488 = scalar_lea.vmem %s2, %s487
        %p489 = pneg %p102
        %p490 = pneg %p99
        %s491 = smul.u32 8, %s29
        %p492 = scmp.lt.s32.totalorder %s491, 15
        %s493 = scalar_select %p492, %s491, 15
        %s494 = smul.addr %s493, 8
        %s495 = scalar_lea.vmem %s3, %s494
        %p496 = pneg %p128
        %p497 = pneg %p125
        %s498 = smul.u32 8, %s29
        %p499 = scmp.lt.s32.totalorder %s498, 15
        %s500 = scalar_select %p499, %s498, 15
        %s501 = smul.addr %s500, 8
        %s502 = scalar_lea.vmem %s4, %s501
        %p503 = pneg %p154
        %p504 = pneg %p151
        %p505 = pneg %p175
        %p506 = pneg %p172
        %p507 = pneg %p196
        %p508 = pneg %p193
        %p509 = pneg %p217
        %p510 = pneg %p214
        %p511 = pneg %p238
        %p512 = pneg %p235
        %p513 = pneg %p259
        %p514 = pneg %p256
        %p515 = pneg %p280
        %p516 = pneg %p277
        %p517 = pneg %p301
        %p518 = pneg %p298
        %p519 = pneg %p322
        %p520 = pneg %p319
        %p521 = pneg %p348
        %p522 = pneg %p345
        %s523 = sand.u32 %s335, 1
        %s524 = scalar_lea.sflag [#allocation4], %s523
        %s525 = sand.u32 %s335, 1
        %s526 = smul.addr %s525, 64
        %s527 = scalar_lea.vmem [#allocation7], %s526
        %s528 = smul.u32 8, %s29
        %p529 = scmp.lt.s32.totalorder %s528, 15
        %s530 = scalar_select %p529, %s528, 15
        %s531 = smul.addr %s530, 8
        %s532 = scalar_lea.vmem %s0, %s531
        %s533 = smul.u32 8, %s29
        %s534 = smul.u32 8, %s29
        %p535 = scmp.lt.s32.totalorder %s534, 15
        %s536 = scalar_select %p535, %s534, 15
        %s537 = smul.addr %s536, 8
        %s538 = scalar_lea.vmem %s1, %s537
        %s539 = smul.u32 8, %s29
        %s540 = smul.u32 8, %s29
        %p541 = scmp.lt.s32.totalorder %s540, 15
        %s542 = scalar_select %p541, %s540, 15
        %s543 = smul.addr %s542, 8
        %s544 = scalar_lea.vmem %s2, %s543
        %s545 = smul.u32 8, %s29
        %s546 = smul.u32 8, %s29
        %p547 = scmp.lt.s32.totalorder %s546, 15
        %s548 = scalar_select %p547, %s546, 15
        %s549 = smul.addr %s548, 8
        %s550 = scalar_lea.vmem %s3, %s549
        %s551 = smul.u32 8, %s29
        %s552 = smul.u32 8, %s29
        %p553 = scmp.lt.s32.totalorder %s552, 15
        %s554 = scalar_select %p553, %s552, 15
        %s555 = smul.addr %s554, 8
        %s556 = scalar_lea.vmem %s4, %s555
        %s557 = smul.u32 8, %s29
        %s558 = smul.u32 8, %s29
        %v560 = vld [vmem:[%s532] sm:$0xff]
        %v561 = vld [vmem:[%s532 + $0x8] sm:$0xff]
        %v562 = vld [vmem:[%s532 + $0x10] sm:$0xff]
        %v563 = vld [vmem:[%s532 + $0x18] sm:$0xff]
        %v564 = vld [vmem:[%s532 + $0x20] sm:$0xff]
        %v565 = vld [vmem:[%s532 + $0x28] sm:$0xff]
        %v566 = vld [vmem:[%s532 + $0x30] sm:$0xff]
        %v567 = vld [vmem:[%s532 + $0x38] sm:$0xff]
        %v568 = vpack.c.bf16 %v561, %v560
        %v569 = vpack.c.bf16 %v563, %v562
        %v570 = vpack.c.bf16 %v565, %v564
        %v571 = vpack.c.bf16 %v567, %v566
        %v572 = vld [vmem:[%s538] sm:$0xff]
        %v573 = vld [vmem:[%s538 + $0x8] sm:$0xff]
        %v574 = vld [vmem:[%s538 + $0x10] sm:$0xff]
        %v575 = vld [vmem:[%s538 + $0x18] sm:$0xff]
        %v576 = vld [vmem:[%s538 + $0x20] sm:$0xff]
        %v577 = vld [vmem:[%s538 + $0x28] sm:$0xff]
        %v578 = vld [vmem:[%s538 + $0x30] sm:$0xff]
        %v579 = vld [vmem:[%s538 + $0x38] sm:$0xff]
        %v580 = vpack.c.bf16 %v573, %v572
        %v581 = vpack.c.bf16 %v575, %v574
        %v582 = vpack.c.bf16 %v577, %v576
        %v583 = vpack.c.bf16 %v579, %v578
        %v584 = vld [vmem:[%s5] sm:$0xf]
        %v585 = vld [vmem:[%s5 + $0x4] sm:$0xf]
        %v586 = vld [vmem:[%s5 + $0x8] sm:$0xf]
        %v587 = vld [vmem:[%s5 + $0xc] sm:$0xf]
        %v588 = vld [vmem:[%s5 + $0x10] sm:$0xf]
        %v589 = vld [vmem:[%s5 + $0x14] sm:$0xf]
        %v590 = vld [vmem:[%s5 + $0x18] sm:$0xf]
        %v591 = vld [vmem:[%s5 + $0x1c] sm:$0xf]
        %v592 = vld [vmem:[%s5 + $0x20] sm:$0xf]
        %v593 = vld [vmem:[%s5 + $0x24] sm:$0xf]
        %v594 = vld [vmem:[%s5 + $0x28] sm:$0xf]
        %v595 = vld [vmem:[%s5 + $0x2c] sm:$0xf]
        %v596 = vld [vmem:[%s5 + $0x30] sm:$0xf]
        %v597 = vld [vmem:[%s5 + $0x34] sm:$0xf]
        %v598 = vld [vmem:[%s5 + $0x38] sm:$0xf]
        %v599 = vld [vmem:[%s5 + $0x3c] sm:$0xf]
        %v600 = vld [vmem:[#allocation2] sm:$0xf]
        %v601 = vld [vmem:[#allocation2 + $0x4] sm:$0xf]
        %v602 = vld [vmem:[#allocation2 + $0x8] sm:$0xf]
        %v603 = vld [vmem:[#allocation2 + $0xc] sm:$0xf]
        %v604 = vld [vmem:[#allocation2 + $0x10] sm:$0xf]
        %v605 = vld [vmem:[#allocation2 + $0x14] sm:$0xf]
        %v606 = vld [vmem:[#allocation2 + $0x18] sm:$0xf]
        %v607 = vld [vmem:[#allocation2 + $0x1c] sm:$0xf]
        %v616 = vunpack.c.l.b16 %v600
        %v617 = vunpack.c.l.b16 %v601
        %v618 = vunpack.c.l.b16 %v602
        %v619 = vunpack.c.l.b16 %v603
        %v620 = vunpack.c.l.b16 %v604
        %v621 = vunpack.c.l.b16 %v605
        %v622 = vunpack.c.l.b16 %v606
        %v623 = vunpack.c.l.b16 %v607
        %v624 = vpack.c.b16 %v617, %v616
        %v625 = vpack.c.b16 %v619, %v618
        %v626 = vpack.c.b16 %v621, %v620
        %v627 = vpack.c.b16 %v623, %v622
        %vm632 = vcmask 523264
        %v634 = vsel %vm632, %v580, 0
        %v637 = vsel %vm632, %v581, 0
        %v640 = vsel %vm632, %v582, 0
        %v643 = vsel %vm632, %v583, 0
        %645 = vmatprep.subr.bf16.mxu0 0
        %646 = vmatpush1.bf16.msra.mxu0 0
        %647 = vmatprep.subr.bf16.mxu0 0
        %648 = vmatpush1.bf16.msra.mxu0 0
        %649 = vmatprep.subr.bf16.mxu0 0
        %650 = vmatpush1.bf16.msra.mxu0 0
        %651 = vmatprep.subr.bf16.mxu0 0
        %652 = vmatpush1.bf16.msra.mxu0 0
        %653 = vmatprep.subr.bf16.mxu0 0
        %654 = vmatpush1.bf16.msra.mxu0 %v627
        %655 = vmatprep.subr.bf16.mxu0 0
        %656 = vmatpush1.bf16.msra.mxu0 %v626
        %657 = vmatprep.subr.bf16.mxu0 0
        %658 = vmatpush1.bf16.msra.mxu0 %v625
        %659 = vmatprep.subr.bf16.mxu0 0
        %660 = vmatpush1.bf16.msra.mxu0 %v624
        %661 = vmatprep.subr.bf16.mxu0 0
        %662 = vmatpush2.bf16.msra.mxu0 0
        %663 = vmatprep.subr.bf16.mxu0 0
        %664 = vmatpush2.bf16.msra.mxu0 0
        %665 = vmatprep.subr.bf16.mxu0 0
        %666 = vmatpush2.bf16.msra.mxu0 0
        %667 = vmatprep.subr.bf16.mxu0 0
        %668 = vmatpush2.bf16.msra.mxu0 0
        %669 = vmatprep.subr.bf16.mxu0 0
        %670 = vmatpush2.bf16.msra.mxu0 0
        %671 = vmatprep.subr.bf16.mxu0 0
        %672 = vmatpush2.bf16.msra.mxu0 0
        %673 = vmatprep.subr.bf16.mxu0 0
        %674 = vmatpush2.bf16.msra.mxu0 0
        %675 = vmatprep.subr.bf16.mxu0 0
        %676 = vmatpush2.bf16.msra.mxu0 0
        %677 = vmatprep.mubr.bf16.mxu0 0
        %678 = vmatmul.mubr.bf16.gmra.mxu0 %v634
        %v679 = vpop.f32.mrf.mxu0
        %v680 = vadd.f32 0.0, %v679
        %v681 = vpop.f32.mrf.mxu0
        %v682 = vpop.f32.mrf.mxu0
        %v683 = vadd.f32 0.0, %v682
        %v684 = vpop.f32.mrf.mxu0
        %685 = vmatprep.mubr.bf16.mxu0 0
        %686 = vmatmul.mubr.bf16.gmra.mxu0 %v637
        %v687 = vpop.f32.mrf.mxu0
        %v688 = vadd.f32 0.0, %v687
        %v689 = vpop.f32.mrf.mxu0
        %v690 = vpop.f32.mrf.mxu0
        %v691 = vadd.f32 0.0, %v690
        %v692 = vpop.f32.mrf.mxu0
        %693 = vmatprep.mubr.bf16.mxu0 0
        %694 = vmatmul.mubr.bf16.gmra.mxu0 %v640
        %v695 = vpop.f32.mrf.mxu0
        %v696 = vadd.f32 0.0, %v695
        %v697 = vpop.f32.mrf.mxu0
        %v698 = vpop.f32.mrf.mxu0
        %v699 = vadd.f32 0.0, %v698
        %v700 = vpop.f32.mrf.mxu0
        %701 = vmatprep.mubr.bf16.mxu0 0
        %702 = vmatmul.mubr.bf16.gmra.mxu0 %v643
        %v703 = vpop.f32.mrf.mxu0
        %v704 = vadd.f32 0.0, %v703
        %v705 = vpop.f32.mrf.mxu0
        %v706 = vpop.f32.mrf.mxu0
        %v707 = vadd.f32 0.0, %v706
        %v708 = vpop.f32.mrf.mxu0
        %709 = vdwg.mxu0
        %v726 = vunpack.c.l.b16 %v584
        %v727 = vunpack.c.l.b16 %v585
        %v728 = vunpack.c.l.b16 %v586
        %v729 = vunpack.c.l.b16 %v587
        %v730 = vunpack.c.l.b16 %v588
        %v731 = vunpack.c.l.b16 %v589
        %v732 = vunpack.c.l.b16 %v590
        %v733 = vunpack.c.l.b16 %v591
        %v734 = vunpack.c.l.b16 %v592
        %v735 = vunpack.c.l.b16 %v593
        %v736 = vunpack.c.l.b16 %v594
        %v737 = vunpack.c.l.b16 %v595
        %v738 = vunpack.c.l.b16 %v596
        %v739 = vunpack.c.l.b16 %v597
        %v740 = vunpack.c.l.b16 %v598
        %v741 = vunpack.c.l.b16 %v599
        %v742 = vpack.c.b16 %v727, %v726
        %v743 = vpack.c.b16 %v729, %v728
        %v744 = vpack.c.b16 %v731, %v730
        %v745 = vpack.c.b16 %v733, %v732
        %v746 = vpack.c.b16 %v735, %v734
        %v747 = vpack.c.b16 %v737, %v736
        %v748 = vpack.c.b16 %v739, %v738
        %v749 = vpack.c.b16 %v741, %v740
        %758 = vmatprep.subr.bf16.mxu0 0
        %759 = vmatpush1.bf16.msra.mxu0 %v749
        %760 = vmatprep.subr.bf16.mxu0 0
        %761 = vmatpush1.bf16.msra.mxu0 %v748
        %762 = vmatprep.subr.bf16.mxu0 0
        %763 = vmatpush1.bf16.msra.mxu0 %v747
        %764 = vmatprep.subr.bf16.mxu0 0
        %765 = vmatpush1.bf16.msra.mxu0 %v746
        %766 = vmatprep.subr.bf16.mxu0 0
        %767 = vmatpush1.bf16.msra.mxu0 %v745
        %768 = vmatprep.subr.bf16.mxu0 0
        %769 = vmatpush1.bf16.msra.mxu0 %v744
        %770 = vmatprep.subr.bf16.mxu0 0
        %771 = vmatpush1.bf16.msra.mxu0 %v743
        %772 = vmatprep.subr.bf16.mxu0 0
        %773 = vmatpush1.bf16.msra.mxu0 %v742
        %774 = vmatprep.subr.bf16.mxu0 0
        %775 = vmatpush2.bf16.msra.mxu0 0
        %776 = vmatprep.subr.bf16.mxu0 0
        %777 = vmatpush2.bf16.msra.mxu0 0
        %778 = vmatprep.subr.bf16.mxu0 0
        %779 = vmatpush2.bf16.msra.mxu0 0
        %780 = vmatprep.subr.bf16.mxu0 0
        %781 = vmatpush2.bf16.msra.mxu0 0
        %782 = vmatprep.subr.bf16.mxu0 0
        %783 = vmatpush2.bf16.msra.mxu0 0
        %784 = vmatprep.subr.bf16.mxu0 0
        %785 = vmatpush2.bf16.msra.mxu0 0
        %786 = vmatprep.subr.bf16.mxu0 0
        %787 = vmatpush2.bf16.msra.mxu0 0
        %788 = vmatprep.subr.bf16.mxu0 0
        %789 = vmatpush2.bf16.msra.mxu0 0
        %790 = vmatprep.mubr.bf16.mxu0 0
        %791 = vmatmul.mubr.bf16.gmra.mxu0 %v568
        %v792 = vpop.f32.mrf.mxu0
        %v793 = vadd.f32 %v680, %v792
        %v794 = vpop.f32.mrf.mxu0
        %v795 = vpop.f32.mrf.mxu0
        %v796 = vadd.f32 %v683, %v795
        %v797 = vpop.f32.mrf.mxu0
        %798 = vmatprep.mubr.bf16.mxu0 0
        %799 = vmatmul.mubr.bf16.gmra.mxu0 %v569
        %v800 = vpop.f32.mrf.mxu0
        %v801 = vadd.f32 %v688, %v800
        %v802 = vpop.f32.mrf.mxu0
        %v803 = vpop.f32.mrf.mxu0
        %v804 = vadd.f32 %v691, %v803
        %v805 = vpop.f32.mrf.mxu0
        %806 = vmatprep.mubr.bf16.mxu0 0
        %807 = vmatmul.mubr.bf16.gmra.mxu0 %v570
        %v808 = vpop.f32.mrf.mxu0
        %v809 = vadd.f32 %v696, %v808
        %v810 = vpop.f32.mrf.mxu0
        %v811 = vpop.f32.mrf.mxu0
        %v812 = vadd.f32 %v699, %v811
        %v813 = vpop.f32.mrf.mxu0
        %814 = vmatprep.mubr.bf16.mxu0 0
        %815 = vmatmul.mubr.bf16.gmra.mxu0 %v571
        %v816 = vpop.f32.mrf.mxu0
        %v817 = vadd.f32 %v704, %v816
        %v818 = vpop.f32.mrf.mxu0
        %v819 = vpop.f32.mrf.mxu0
        %v820 = vadd.f32 %v707, %v819
        %v821 = vpop.f32.mrf.mxu0
        %822 = vdwg.mxu0
        %v823 = vld [vmem:[%s7] sm:$0x1]
        %v825 = vlaneseq
        %v826 = vshrl.u32 %v825, 7
        %v827 = vsub.s32 0, %v826
        %v828 = vrot.slane %v823, %v827
        %v830 = vadd.f32 %v793, %v828
        %v831 = vadd.f32 %v796, %v828
        %v832 = vadd.f32 %v801, %v828
        %v833 = vadd.f32 %v804, %v828
        %v834 = vadd.f32 %v809, %v828
        %v835 = vadd.f32 %v812, %v828
        %v836 = vadd.f32 %v817, %v828
        %v837 = vadd.f32 %v820, %v828
        %v838 = vsub.f32 0.0, %v830
        %v839 = vsub.f32 0.0, %v831
        %v840 = vsub.f32 0.0, %v832
        %v841 = vsub.f32 0.0, %v833
        %v842 = vsub.f32 0.0, %v834
        %v843 = vsub.f32 0.0, %v835
        %v844 = vsub.f32 0.0, %v836
        %v845 = vsub.f32 0.0, %v837
        %v846 = vmul.f32 %v838, 1.442695
        %v847 = vpow.pop %v846
        %v848 = vmul.f32 %v839, 1.442695
        %v849 = vpow.pop %v848
        %v850 = vmul.f32 %v840, 1.442695
        %v851 = vpow.pop %v850
        %v852 = vmul.f32 %v841, 1.442695
        %v853 = vpow.pop %v852
        %v854 = vmul.f32 %v842, 1.442695
        %v855 = vpow.pop %v854
        %v856 = vmul.f32 %v843, 1.442695
        %v857 = vpow.pop %v856
        %v858 = vmul.f32 %v844, 1.442695
        %v859 = vpow.pop %v858
        %v860 = vmul.f32 %v845, 1.442695
        %v861 = vpow.pop %v860
        %v862 = vadd.f32 %v847, 1.0
        %v863 = vadd.f32 %v849, 1.0
        %v864 = vadd.f32 %v851, 1.0
        %v865 = vadd.f32 %v853, 1.0
        %v866 = vadd.f32 %v855, 1.0
        %v867 = vadd.f32 %v857, 1.0
        %v868 = vadd.f32 %v859, 1.0
        %v869 = vadd.f32 %v861, 1.0
        %v870 = vrcp.pop %v862
        %v871 = vrcp.pop %v863
        %v872 = vrcp.pop %v864
        %v873 = vrcp.pop %v865
        %v874 = vrcp.pop %v866
        %v875 = vrcp.pop %v867
        %v876 = vrcp.pop %v868
        %v877 = vrcp.pop %v869
        %v878 = vmul.f32 %v830, %v870
        %v879 = vmul.f32 %v831, %v871
        %v880 = vmul.f32 %v832, %v872
        %v881 = vmul.f32 %v833, %v873
        %v882 = vmul.f32 %v834, %v874
        %v883 = vmul.f32 %v835, %v875
        %v884 = vmul.f32 %v836, %v876
        %v885 = vmul.f32 %v837, %v877
        %v886 = vpack.c.bf16 %v879, %v878
        %v887 = vpack.c.bf16 %v881, %v880
        %v888 = vpack.c.bf16 %v883, %v882
        %v889 = vpack.c.bf16 %v885, %v884
        %v890 = vld [vmem:[%s8] sm:$0xf]
        %v891 = vld [vmem:[%s8 + $0x4] sm:$0xf]
        %v892 = vld [vmem:[%s8 + $0x8] sm:$0xf]
        %v893 = vld [vmem:[%s8 + $0xc] sm:$0xf]
        %v894 = vld [vmem:[%s8 + $0x10] sm:$0xf]
        %v895 = vld [vmem:[%s8 + $0x14] sm:$0xf]
        %v896 = vld [vmem:[%s8 + $0x18] sm:$0xf]
        %v897 = vld [vmem:[%s8 + $0x1c] sm:$0xf]
        %v898 = vld [vmem:[%s8 + $0x20] sm:$0xf]
        %v899 = vld [vmem:[%s8 + $0x24] sm:$0xf]
        %v900 = vld [vmem:[%s8 + $0x28] sm:$0xf]
        %v901 = vld [vmem:[%s8 + $0x2c] sm:$0xf]
        %v902 = vld [vmem:[%s8 + $0x30] sm:$0xf]
        %v903 = vld [vmem:[%s8 + $0x34] sm:$0xf]
        %v904 = vld [vmem:[%s8 + $0x38] sm:$0xf]
        %v905 = vld [vmem:[%s8 + $0x3c] sm:$0xf]
        %v906 = vld [vmem:[%s9] sm:$0x1]
        %v908 = vlaneseq
        %v909 = vshrl.u32 %v908, 7
        %v910 = vsub.s32 0, %v909
        %v911 = vrot.slane %v906, %v910
        %v929 = vunpack.c.l.b16 %v890
        %v930 = vunpack.c.l.b16 %v891
        %v931 = vunpack.c.l.b16 %v892
        %v932 = vunpack.c.l.b16 %v893
        %v933 = vunpack.c.l.b16 %v894
        %v934 = vunpack.c.l.b16 %v895
        %v935 = vunpack.c.l.b16 %v896
        %v936 = vunpack.c.l.b16 %v897
        %v937 = vunpack.c.l.b16 %v898
        %v938 = vunpack.c.l.b16 %v899
        %v939 = vunpack.c.l.b16 %v900
        %v940 = vunpack.c.l.b16 %v901
        %v941 = vunpack.c.l.b16 %v902
        %v942 = vunpack.c.l.b16 %v903
        %v943 = vunpack.c.l.b16 %v904
        %v944 = vunpack.c.l.b16 %v905
        %v945 = vpack.c.b16 %v930, %v929
        %v946 = vpack.c.b16 %v932, %v931
        %v947 = vpack.c.b16 %v934, %v933
        %v948 = vpack.c.b16 %v936, %v935
        %v949 = vpack.c.b16 %v938, %v937
        %v950 = vpack.c.b16 %v940, %v939
        %v951 = vpack.c.b16 %v942, %v941
        %v952 = vpack.c.b16 %v944, %v943
        %961 = vmatprep.subr.bf16.mxu0 0
        %962 = vmatpush1.bf16.msra.mxu0 %v952
        %963 = vmatprep.subr.bf16.mxu0 0
        %964 = vmatpush1.bf16.msra.mxu0 %v951
        %965 = vmatprep.subr.bf16.mxu0 0
        %966 = vmatpush1.bf16.msra.mxu0 %v950
        %967 = vmatprep.subr.bf16.mxu0 0
        %968 = vmatpush1.bf16.msra.mxu0 %v949
        %969 = vmatprep.subr.bf16.mxu0 0
        %970 = vmatpush1.bf16.msra.mxu0 %v948
        %971 = vmatprep.subr.bf16.mxu0 0
        %972 = vmatpush1.bf16.msra.mxu0 %v947
        %973 = vmatprep.subr.bf16.mxu0 0
        %974 = vmatpush1.bf16.msra.mxu0 %v946
        %975 = vmatprep.subr.bf16.mxu0 0
        %976 = vmatpush1.bf16.msra.mxu0 %v945
        %977 = vmatprep.subr.bf16.mxu0 0
        %978 = vmatpush2.bf16.msra.mxu0 0
        %979 = vmatprep.subr.bf16.mxu0 0
        %980 = vmatpush2.bf16.msra.mxu0 0
        %981 = vmatprep.subr.bf16.mxu0 0
        %982 = vmatpush2.bf16.msra.mxu0 0
        %983 = vmatprep.subr.bf16.mxu0 0
        %984 = vmatpush2.bf16.msra.mxu0 0
        %985 = vmatprep.subr.bf16.mxu0 0
        %986 = vmatpush2.bf16.msra.mxu0 0
        %987 = vmatprep.subr.bf16.mxu0 0
        %988 = vmatpush2.bf16.msra.mxu0 0
        %989 = vmatprep.subr.bf16.mxu0 0
        %990 = vmatpush2.bf16.msra.mxu0 0
        %991 = vmatprep.subr.bf16.mxu0 0
        %992 = vmatpush2.bf16.msra.mxu0 0
        %993 = vmatprep.mubr.bf16.mxu0 0
        %994 = vmatmul.mubr.bf16.gmra.mxu0 %v886
        %v995 = vpop.f32.mrf.mxu0
        %v996 = vadd.f32 %v911, %v995
        %v997 = vpop.f32.mrf.mxu0
        %v998 = vpop.f32.mrf.mxu0
        %v999 = vadd.f32 %v911, %v998
        %v1000 = vpop.f32.mrf.mxu0
        %1001 = vmatprep.mubr.bf16.mxu0 0
        %1002 = vmatmul.mubr.bf16.gmra.mxu0 %v887
        %v1003 = vpop.f32.mrf.mxu0
        %v1004 = vadd.f32 %v911, %v1003
        %v1005 = vpop.f32.mrf.mxu0
        %v1006 = vpop.f32.mrf.mxu0
        %v1007 = vadd.f32 %v911, %v1006
        %v1008 = vpop.f32.mrf.mxu0
        %1009 = vmatprep.mubr.bf16.mxu0 0
        %1010 = vmatmul.mubr.bf16.gmra.mxu0 %v888
        %v1011 = vpop.f32.mrf.mxu0
        %v1012 = vadd.f32 %v911, %v1011
        %v1013 = vpop.f32.mrf.mxu0
        %v1014 = vpop.f32.mrf.mxu0
        %v1015 = vadd.f32 %v911, %v1014
        %v1016 = vpop.f32.mrf.mxu0
        %1017 = vmatprep.mubr.bf16.mxu0 0
        %1018 = vmatmul.mubr.bf16.gmra.mxu0 %v889
        %v1019 = vpop.f32.mrf.mxu0
        %v1020 = vadd.f32 %v911, %v1019
        %v1021 = vpop.f32.mrf.mxu0
        %v1022 = vpop.f32.mrf.mxu0
        %v1023 = vadd.f32 %v911, %v1022
        %v1024 = vpop.f32.mrf.mxu0
        %1025 = vdwg.mxu0
        %v1026 = vsub.f32 0.0, %v996
        %v1027 = vsub.f32 0.0, %v999
        %v1028 = vsub.f32 0.0, %v1004
        %v1029 = vsub.f32 0.0, %v1007
        %v1030 = vsub.f32 0.0, %v1012
        %v1031 = vsub.f32 0.0, %v1015
        %v1032 = vsub.f32 0.0, %v1020
        %v1033 = vsub.f32 0.0, %v1023
        %v1034 = vmul.f32 %v1026, 1.442695
        %v1035 = vpow.pop %v1034
        %v1036 = vmul.f32 %v1027, 1.442695
        %v1037 = vpow.pop %v1036
        %v1038 = vmul.f32 %v1028, 1.442695
        %v1039 = vpow.pop %v1038
        %v1040 = vmul.f32 %v1029, 1.442695
        %v1041 = vpow.pop %v1040
        %v1042 = vmul.f32 %v1030, 1.442695
        %v1043 = vpow.pop %v1042
        %v1044 = vmul.f32 %v1031, 1.442695
        %v1045 = vpow.pop %v1044
        %v1046 = vmul.f32 %v1032, 1.442695
        %v1047 = vpow.pop %v1046
        %v1048 = vmul.f32 %v1033, 1.442695
        %v1049 = vpow.pop %v1048
        %v1050 = vadd.f32 %v1035, 1.0
        %v1051 = vadd.f32 %v1037, 1.0
        %v1052 = vadd.f32 %v1039, 1.0
        %v1053 = vadd.f32 %v1041, 1.0
        %v1054 = vadd.f32 %v1043, 1.0
        %v1055 = vadd.f32 %v1045, 1.0
        %v1056 = vadd.f32 %v1047, 1.0
        %v1057 = vadd.f32 %v1049, 1.0
        %v1058 = vrcp.pop %v1050
        %v1059 = vrcp.pop %v1051
        %v1060 = vrcp.pop %v1052
        %v1061 = vrcp.pop %v1053
        %v1062 = vrcp.pop %v1054
        %v1063 = vrcp.pop %v1055
        %v1064 = vrcp.pop %v1056
        %v1065 = vrcp.pop %v1057
        %v1066 = vmul.f32 %v996, %v1058
        %v1067 = vmul.f32 %v999, %v1059
        %v1068 = vmul.f32 %v1004, %v1060
        %v1069 = vmul.f32 %v1007, %v1061
        %v1070 = vmul.f32 %v1012, %v1062
        %v1071 = vmul.f32 %v1015, %v1063
        %v1072 = vmul.f32 %v1020, %v1064
        %v1073 = vmul.f32 %v1023, %v1065
        %v1074 = vpack.c.bf16 %v1067, %v1066
        %v1075 = vpack.c.bf16 %v1069, %v1068
        %v1076 = vpack.c.bf16 %v1071, %v1070
        %v1077 = vpack.c.bf16 %v1073, %v1072
        %v1078 = vld [vmem:[%s10] sm:$0xf]
        %v1079 = vld [vmem:[%s10 + $0x4] sm:$0xf]
        %v1080 = vld [vmem:[%s10 + $0x8] sm:$0xf]
        %v1081 = vld [vmem:[%s10 + $0xc] sm:$0xf]
        %v1082 = vld [vmem:[%s10 + $0x10] sm:$0xf]
        %v1083 = vld [vmem:[%s10 + $0x14] sm:$0xf]
        %v1084 = vld [vmem:[%s10 + $0x18] sm:$0xf]
        %v1085 = vld [vmem:[%s10 + $0x1c] sm:$0xf]
        %v1086 = vld [vmem:[%s10 + $0x20] sm:$0xf]
        %v1087 = vld [vmem:[%s10 + $0x24] sm:$0xf]
        %v1088 = vld [vmem:[%s10 + $0x28] sm:$0xf]
        %v1089 = vld [vmem:[%s10 + $0x2c] sm:$0xf]
        %v1090 = vld [vmem:[%s10 + $0x30] sm:$0xf]
        %v1091 = vld [vmem:[%s10 + $0x34] sm:$0xf]
        %v1092 = vld [vmem:[%s10 + $0x38] sm:$0xf]
        %v1093 = vld [vmem:[%s10 + $0x3c] sm:$0xf]
        %v1094 = vld [vmem:[%s11] sm:$0x1]
        %v1096 = vlaneseq
        %v1097 = vshrl.u32 %v1096, 7
        %v1098 = vsub.s32 0, %v1097
        %v1099 = vrot.slane %v1094, %v1098
        %v1117 = vunpack.c.l.b16 %v1078
        %v1118 = vunpack.c.l.b16 %v1079
        %v1119 = vunpack.c.l.b16 %v1080
        %v1120 = vunpack.c.l.b16 %v1081
        %v1121 = vunpack.c.l.b16 %v1082
        %v1122 = vunpack.c.l.b16 %v1083
        %v1123 = vunpack.c.l.b16 %v1084
        %v1124 = vunpack.c.l.b16 %v1085
        %v1125 = vunpack.c.l.b16 %v1086
        %v1126 = vunpack.c.l.b16 %v1087
        %v1127 = vunpack.c.l.b16 %v1088
        %v1128 = vunpack.c.l.b16 %v1089
        %v1129 = vunpack.c.l.b16 %v1090
        %v1130 = vunpack.c.l.b16 %v1091
        %v1131 = vunpack.c.l.b16 %v1092
        %v1132 = vunpack.c.l.b16 %v1093
        %v1133 = vpack.c.b16 %v1118, %v1117
        %v1134 = vpack.c.b16 %v1120, %v1119
        %v1135 = vpack.c.b16 %v1122, %v1121
        %v1136 = vpack.c.b16 %v1124, %v1123
        %v1137 = vpack.c.b16 %v1126, %v1125
        %v1138 = vpack.c.b16 %v1128, %v1127
        %v1139 = vpack.c.b16 %v1130, %v1129
        %v1140 = vpack.c.b16 %v1132, %v1131
        %1149 = vmatprep.subr.bf16.mxu0 0
        %1150 = vmatpush1.bf16.msra.mxu0 %v1140
        %1151 = vmatprep.subr.bf16.mxu0 0
        %1152 = vmatpush1.bf16.msra.mxu0 %v1139
        %1153 = vmatprep.subr.bf16.mxu0 0
        %1154 = vmatpush1.bf16.msra.mxu0 %v1138
        %1155 = vmatprep.subr.bf16.mxu0 0
        %1156 = vmatpush1.bf16.msra.mxu0 %v1137
        %1157 = vmatprep.subr.bf16.mxu0 0
        %1158 = vmatpush1.bf16.msra.mxu0 %v1136
        %1159 = vmatprep.subr.bf16.mxu0 0
        %1160 = vmatpush1.bf16.msra.mxu0 %v1135
        %1161 = vmatprep.subr.bf16.mxu0 0
        %1162 = vmatpush1.bf16.msra.mxu0 %v1134
        %1163 = vmatprep.subr.bf16.mxu0 0
        %1164 = vmatpush1.bf16.msra.mxu0 %v1133
        %1165 = vmatprep.subr.bf16.mxu0 0
        %1166 = vmatpush2.bf16.msra.mxu0 0
        %1167 = vmatprep.subr.bf16.mxu0 0
        %1168 = vmatpush2.bf16.msra.mxu0 0
        %1169 = vmatprep.subr.bf16.mxu0 0
        %1170 = vmatpush2.bf16.msra.mxu0 0
        %1171 = vmatprep.subr.bf16.mxu0 0
        %1172 = vmatpush2.bf16.msra.mxu0 0
        %1173 = vmatprep.subr.bf16.mxu0 0
        %1174 = vmatpush2.bf16.msra.mxu0 0
        %1175 = vmatprep.subr.bf16.mxu0 0
        %1176 = vmatpush2.bf16.msra.mxu0 0
        %1177 = vmatprep.subr.bf16.mxu0 0
        %1178 = vmatpush2.bf16.msra.mxu0 0
        %1179 = vmatprep.subr.bf16.mxu0 0
        %1180 = vmatpush2.bf16.msra.mxu0 0
        %1181 = vmatprep.mubr.bf16.mxu0 0
        %1182 = vmatmul.mubr.bf16.gmra.mxu0 %v1074
        %v1183 = vpop.f32.mrf.mxu0
        %v1184 = vadd.f32 %v1099, %v1183
        %v1185 = vpop.f32.mrf.mxu0
        %v1186 = vpop.f32.mrf.mxu0
        %v1187 = vadd.f32 %v1099, %v1186
        %v1188 = vpop.f32.mrf.mxu0
        %1189 = vmatprep.mubr.bf16.mxu0 0
        %1190 = vmatmul.mubr.bf16.gmra.mxu0 %v1075
        %v1191 = vpop.f32.mrf.mxu0
        %v1192 = vadd.f32 %v1099, %v1191
        %v1193 = vpop.f32.mrf.mxu0
        %v1194 = vpop.f32.mrf.mxu0
        %v1195 = vadd.f32 %v1099, %v1194
        %v1196 = vpop.f32.mrf.mxu0
        %1197 = vmatprep.mubr.bf16.mxu0 0
        %1198 = vmatmul.mubr.bf16.gmra.mxu0 %v1076
        %v1199 = vpop.f32.mrf.mxu0
        %v1200 = vadd.f32 %v1099, %v1199
        %v1201 = vpop.f32.mrf.mxu0
        %v1202 = vpop.f32.mrf.mxu0
        %v1203 = vadd.f32 %v1099, %v1202
        %v1204 = vpop.f32.mrf.mxu0
        %1205 = vmatprep.mubr.bf16.mxu0 0
        %1206 = vmatmul.mubr.bf16.gmra.mxu0 %v1077
        %v1207 = vpop.f32.mrf.mxu0
        %v1208 = vadd.f32 %v1099, %v1207
        %v1209 = vpop.f32.mrf.mxu0
        %v1210 = vpop.f32.mrf.mxu0
        %v1211 = vadd.f32 %v1099, %v1210
        %v1212 = vpop.f32.mrf.mxu0
        %1213 = vdwg.mxu0
        %v1214 = vsub.f32 0.0, %v1184
        %v1215 = vsub.f32 0.0, %v1187
        %v1216 = vsub.f32 0.0, %v1192
        %v1217 = vsub.f32 0.0, %v1195
        %v1218 = vsub.f32 0.0, %v1200
        %v1219 = vsub.f32 0.0, %v1203
        %v1220 = vsub.f32 0.0, %v1208
        %v1221 = vsub.f32 0.0, %v1211
        %v1222 = vmul.f32 %v1214, 1.442695
        %v1223 = vpow.pop %v1222
        %v1224 = vmul.f32 %v1215, 1.442695
        %v1225 = vpow.pop %v1224
        %v1226 = vmul.f32 %v1216, 1.442695
        %v1227 = vpow.pop %v1226
        %v1228 = vmul.f32 %v1217, 1.442695
        %v1229 = vpow.pop %v1228
        %v1230 = vmul.f32 %v1218, 1.442695
        %v1231 = vpow.pop %v1230
        %v1232 = vmul.f32 %v1219, 1.442695
        %v1233 = vpow.pop %v1232
        %v1234 = vmul.f32 %v1220, 1.442695
        %v1235 = vpow.pop %v1234
        %v1236 = vmul.f32 %v1221, 1.442695
        %v1237 = vpow.pop %v1236
        %v1238 = vadd.f32 %v1223, 1.0
        %v1239 = vadd.f32 %v1225, 1.0
        %v1240 = vadd.f32 %v1227, 1.0
        %v1241 = vadd.f32 %v1229, 1.0
        %v1242 = vadd.f32 %v1231, 1.0
        %v1243 = vadd.f32 %v1233, 1.0
        %v1244 = vadd.f32 %v1235, 1.0
        %v1245 = vadd.f32 %v1237, 1.0
        %v1246 = vrcp.pop %v1238
        %v1247 = vrcp.pop %v1239
        %v1248 = vrcp.pop %v1240
        %v1249 = vrcp.pop %v1241
        %v1250 = vrcp.pop %v1242
        %v1251 = vrcp.pop %v1243
        %v1252 = vrcp.pop %v1244
        %v1253 = vrcp.pop %v1245
        %v1254 = vld [vmem:[%s544] sm:$0xff]
        %v1255 = vld [vmem:[%s544 + $0x8] sm:$0xff]
        %v1256 = vld [vmem:[%s544 + $0x10] sm:$0xff]
        %v1257 = vld [vmem:[%s544 + $0x18] sm:$0xff]
        %v1258 = vld [vmem:[%s544 + $0x20] sm:$0xff]
        %v1259 = vld [vmem:[%s544 + $0x28] sm:$0xff]
        %v1260 = vld [vmem:[%s544 + $0x30] sm:$0xff]
        %v1261 = vld [vmem:[%s544 + $0x38] sm:$0xff]
        %v1262 = vsub.f32 %v560, %v1254
        %v1263 = vsub.f32 %v561, %v1255
        %v1264 = vsub.f32 %v562, %v1256
        %v1265 = vsub.f32 %v563, %v1257
        %v1266 = vsub.f32 %v564, %v1258
        %v1267 = vsub.f32 %v565, %v1259
        %v1268 = vsub.f32 %v566, %v1260
        %v1269 = vsub.f32 %v567, %v1261
        %v1270 = vand.u32 2147483647, %v1262
        %v1271 = vand.u32 2147483647, %v1263
        %v1272 = vand.u32 2147483647, %v1264
        %v1273 = vand.u32 2147483647, %v1265
        %v1274 = vand.u32 2147483647, %v1266
        %v1275 = vand.u32 2147483647, %v1267
        %v1276 = vand.u32 2147483647, %v1268
        %v1277 = vand.u32 2147483647, %v1269
        %v1278 = vrot.slane %v1270, 7
        %v1279 = vrot.slane %v1271, 7
        %v1280 = vrot.slane %v1272, 7
        %v1281 = vrot.slane %v1273, 7
        %v1282 = vrot.slane %v1274, 7
        %v1283 = vrot.slane %v1275, 7
        %v1284 = vrot.slane %v1276, 7
        %v1285 = vrot.slane %v1277, 7
        %v1286 = vlaneseq
        %v1287 = vshrl.u32 %v1286, 7
        %vm1288 = vcmp.lt.s32.totalorder %v1287, 1
        %v1289 = vsel %vm1288, %v1284, %v1285
        %v1290 = vsel %vm1288, %v1283, %v1284
        %v1291 = vsel %vm1288, %v1282, %v1283
        %v1292 = vsel %vm1288, %v1281, %v1282
        %v1293 = vsel %vm1288, %v1280, %v1281
        %v1294 = vsel %vm1288, %v1279, %v1280
        %v1295 = vsel %vm1288, %v1278, %v1279
        %v1296 = vsel %vm1288, %v1285, %v1278
        %v1297 = vld [vmem:[%s550] sm:$0xff]
        %v1298 = vld [vmem:[%s550 + $0x8] sm:$0xff]
        %v1299 = vld [vmem:[%s550 + $0x10] sm:$0xff]
        %v1300 = vld [vmem:[%s550 + $0x18] sm:$0xff]
        %v1301 = vld [vmem:[%s550 + $0x20] sm:$0xff]
        %v1302 = vld [vmem:[%s550 + $0x28] sm:$0xff]
        %v1303 = vld [vmem:[%s550 + $0x30] sm:$0xff]
        %v1304 = vld [vmem:[%s550 + $0x38] sm:$0xff]
        %1306 = vset.pattern.permute.xlu0 0
        %1307 = vperm.xlu0 %1306, %v1297
        %v1308 = vpop.permute.xlu0 %1307
        %1311 = vset.pattern.permute.xlu0 0
        %1312 = vperm.xlu0 %1311, %v1298
        %v1313 = vpop.permute.xlu0 %1312
        %1316 = vset.pattern.permute.xlu0 0
        %1317 = vperm.xlu0 %1316, %v1299
        %v1318 = vpop.permute.xlu0 %1317
        %1321 = vset.pattern.permute.xlu0 0
        %1322 = vperm.xlu0 %1321, %v1300
        %v1323 = vpop.permute.xlu0 %1322
        %1326 = vset.pattern.permute.xlu0 0
        %1327 = vperm.xlu0 %1326, %v1301
        %v1328 = vpop.permute.xlu0 %1327
        %1331 = vset.pattern.permute.xlu0 0
        %1332 = vperm.xlu0 %1331, %v1302
        %v1333 = vpop.permute.xlu0 %1332
        %1336 = vset.pattern.permute.xlu0 0
        %1337 = vperm.xlu0 %1336, %v1303
        %v1338 = vpop.permute.xlu0 %1337
        %1341 = vset.pattern.permute.xlu0 0
        %1342 = vperm.xlu0 %1341, %v1304
        %v1343 = vpop.permute.xlu0 %1342
        %v1345 = vmul.f32 %v1296, %v1308
        %v1346 = vmul.f32 %v1295, %v1313
        %v1347 = vmul.f32 %v1294, %v1318
        %v1348 = vmul.f32 %v1293, %v1323
        %v1349 = vmul.f32 %v1292, %v1328
        %v1350 = vmul.f32 %v1291, %v1333
        %v1351 = vmul.f32 %v1290, %v1338
        %v1352 = vmul.f32 %v1289, %v1343
        %v1353 = vrot.slane %v1270, 1
        %v1354 = vrot.slane %v1271, 1
        %v1355 = vrot.slane %v1272, 1
        %v1356 = vrot.slane %v1273, 1
        %v1357 = vrot.slane %v1274, 1
        %v1358 = vrot.slane %v1275, 1
        %v1359 = vrot.slane %v1276, 1
        %v1360 = vrot.slane %v1277, 1
        %vm1361 = vcmp.lt.s32.totalorder %v1287, 7
        %v1362 = vsel %vm1361, %v1359, %v1360
        %v1363 = vsel %vm1361, %v1358, %v1359
        %v1364 = vsel %vm1361, %v1357, %v1358
        %v1365 = vsel %vm1361, %v1356, %v1357
        %v1366 = vsel %vm1361, %v1355, %v1356
        %v1367 = vsel %vm1361, %v1354, %v1355
        %v1368 = vsel %vm1361, %v1353, %v1354
        %v1369 = vsel %vm1361, %v1360, %v1353
        %v1370 = vld [vmem:[%s556] sm:$0xff]
        %v1371 = vld [vmem:[%s556 + $0x8] sm:$0xff]
        %v1372 = vld [vmem:[%s556 + $0x10] sm:$0xff]
        %v1373 = vld [vmem:[%s556 + $0x18] sm:$0xff]
        %v1374 = vld [vmem:[%s556 + $0x20] sm:$0xff]
        %v1375 = vld [vmem:[%s556 + $0x28] sm:$0xff]
        %v1376 = vld [vmem:[%s556 + $0x30] sm:$0xff]
        %v1377 = vld [vmem:[%s556 + $0x38] sm:$0xff]
        %1379 = vset.pattern.permute.xlu0 0
        %1380 = vperm.xlu0 %1379, %v1370
        %v1381 = vpop.permute.xlu0 %1380
        %1384 = vset.pattern.permute.xlu0 0
        %1385 = vperm.xlu0 %1384, %v1371
        %v1386 = vpop.permute.xlu0 %1385
        %1389 = vset.pattern.permute.xlu0 0
        %1390 = vperm.xlu0 %1389, %v1372
        %v1391 = vpop.permute.xlu0 %1390
        %1394 = vset.pattern.permute.xlu0 0
        %1395 = vperm.xlu0 %1394, %v1373
        %v1396 = vpop.permute.xlu0 %1395
        %1399 = vset.pattern.permute.xlu0 0
        %1400 = vperm.xlu0 %1399, %v1374
        %v1401 = vpop.permute.xlu0 %1400
        %1404 = vset.pattern.permute.xlu0 0
        %1405 = vperm.xlu0 %1404, %v1375
        %v1406 = vpop.permute.xlu0 %1405
        %1409 = vset.pattern.permute.xlu0 0
        %1410 = vperm.xlu0 %1409, %v1376
        %v1411 = vpop.permute.xlu0 %1410
        %1414 = vset.pattern.permute.xlu0 0
        %1415 = vperm.xlu0 %1414, %v1377
        %v1416 = vpop.permute.xlu0 %1415
        %v1418 = vmul.f32 %v1368, %v1381
        %v1419 = vmul.f32 %v1367, %v1386
        %v1420 = vmul.f32 %v1366, %v1391
        %v1421 = vmul.f32 %v1365, %v1396
        %v1422 = vmul.f32 %v1364, %v1401
        %v1423 = vmul.f32 %v1363, %v1406
        %v1424 = vmul.f32 %v1362, %v1411
        %v1425 = vmul.f32 %v1369, %v1416
        %s1426 = sld [smem:[#allocation6]]
        %s1427 = sld [smem:[#allocation6 + $0x1]]
        %s1428 = sld [smem:[#allocation6 + $0x2]]
        %s1429 = sld [smem:[#allocation6 + $0x3]]
        %v1430 = vstv %s1426
        %v1431 = vmul.f32 %v1430, %v1345
        %v1432 = vmul.f32 %v1430, %v1346
        %v1433 = vmul.f32 %v1430, %v1347
        %v1434 = vmul.f32 %v1430, %v1348
        %v1435 = vmul.f32 %v1430, %v1349
        %v1436 = vmul.f32 %v1430, %v1350
        %v1437 = vmul.f32 %v1430, %v1351
        %v1438 = vmul.f32 %v1430, %v1352
        %v1439 = vstv %s1427
        %v1440 = vmul.f32 %v1439, %v1270
        %v1441 = vmul.f32 %v1439, %v1271
        %v1442 = vmul.f32 %v1439, %v1272
        %v1443 = vmul.f32 %v1439, %v1273
        %v1444 = vmul.f32 %v1439, %v1274
        %v1445 = vmul.f32 %v1439, %v1275
        %v1446 = vmul.f32 %v1439, %v1276
        %v1447 = vmul.f32 %v1439, %v1277
        %v1448 = vadd.f32 %v1431, %v1440
        %v1449 = vadd.f32 %v1432, %v1441
        %v1450 = vadd.f32 %v1433, %v1442
        %v1451 = vadd.f32 %v1434, %v1443
        %v1452 = vadd.f32 %v1435, %v1444
        %v1453 = vadd.f32 %v1436, %v1445
        %v1454 = vadd.f32 %v1437, %v1446
        %v1455 = vadd.f32 %v1438, %v1447
        %v1456 = vstv %s1428
        %v1457 = vmul.f32 %v1456, %v1418
        %v1458 = vmul.f32 %v1456, %v1419
        %v1459 = vmul.f32 %v1456, %v1420
        %v1460 = vmul.f32 %v1456, %v1421
        %v1461 = vmul.f32 %v1456, %v1422
        %v1462 = vmul.f32 %v1456, %v1423
        %v1463 = vmul.f32 %v1456, %v1424
        %v1464 = vmul.f32 %v1456, %v1425
        %v1465 = vadd.f32 %v1448, %v1457
        %v1466 = vadd.f32 %v1449, %v1458
        %v1467 = vadd.f32 %v1450, %v1459
        %v1468 = vadd.f32 %v1451, %v1460
        %v1469 = vadd.f32 %v1452, %v1461
        %v1470 = vadd.f32 %v1453, %v1462
        %v1471 = vadd.f32 %v1454, %v1463
        %v1472 = vadd.f32 %v1455, %v1464
        %v1473 = vsub.f32 0.0, %v1465
        %v1474 = vsub.f32 0.0, %v1466
        %v1475 = vsub.f32 0.0, %v1467
        %v1476 = vsub.f32 0.0, %v1468
        %v1477 = vsub.f32 0.0, %v1469
        %v1478 = vsub.f32 0.0, %v1470
        %v1479 = vsub.f32 0.0, %v1471
        %v1480 = vsub.f32 0.0, %v1472
        %v1481 = vmul.f32 %v1473, 1.442695
        %v1482 = vpow.pop %v1481
        %v1483 = vmul.f32 %v1474, 1.442695
        %v1484 = vpow.pop %v1483
        %v1485 = vmul.f32 %v1475, 1.442695
        %v1486 = vpow.pop %v1485
        %v1487 = vmul.f32 %v1476, 1.442695
        %v1488 = vpow.pop %v1487
        %v1489 = vmul.f32 %v1477, 1.442695
        %v1490 = vpow.pop %v1489
        %v1491 = vmul.f32 %v1478, 1.442695
        %v1492 = vpow.pop %v1491
        %v1493 = vmul.f32 %v1479, 1.442695
        %v1494 = vpow.pop %v1493
        %v1495 = vmul.f32 %v1480, 1.442695
        %v1496 = vpow.pop %v1495
        %v1497 = vmul.f32 %v1246, %v1482
        %v1498 = vmul.f32 %v1247, %v1484
        %v1499 = vmul.f32 %v1248, %v1486
        %v1500 = vmul.f32 %v1249, %v1488
        %v1501 = vmul.f32 %v1250, %v1490
        %v1502 = vmul.f32 %v1251, %v1492
        %v1503 = vmul.f32 %v1252, %v1494
        %v1504 = vmul.f32 %v1253, %v1496
        %v1505 = vstv %s1429
        %v1506 = vmul.f32 %v1497, %v1505
        %v1507 = vmul.f32 %v1498, %v1505
        %v1508 = vmul.f32 %v1499, %v1505
        %v1509 = vmul.f32 %v1500, %v1505
        %v1510 = vmul.f32 %v1501, %v1505
        %v1511 = vmul.f32 %v1502, %v1505
        %v1512 = vmul.f32 %v1503, %v1505
        %v1513 = vmul.f32 %v1504, %v1505
        %1514 = vst [vmem:[%s527] sm:$0xff] %v1506
        %1515 = vst [vmem:[%s527 + $0x8] sm:$0xff] %v1507
        %1516 = vst [vmem:[%s527 + $0x10] sm:$0xff] %v1508
        %1517 = vst [vmem:[%s527 + $0x18] sm:$0xff] %v1509
        %1518 = vst [vmem:[%s527 + $0x20] sm:$0xff] %v1510
        %1519 = vst [vmem:[%s527 + $0x28] sm:$0xff] %v1511
        %1520 = vst [vmem:[%s527 + $0x30] sm:$0xff] %v1512
        %1521 = vst [vmem:[%s527 + $0x38] sm:$0xff] %v1513
        %s1522 = sand.u32 %s335, 1
        %s1523 = scalar_lea.sflag [#allocation4], %s1522
        %s1524 = sand.u32 %s335, 1
        %s1525 = smul.addr %s1524, 64
        %s1526 = scalar_lea.vmem [#allocation7], %s1525
        // Predicated region
        $region81: #{tpu_custom_call.1} parent=71 // pred_check
          %p1527 = pneg %p345
        $region82: #{tpu_custom_call.1} parent=71 // pred_check_branch
          %1529 = sbr.rel (%p1527) target = $region84
        $region83: #{tpu_custom_call.1} parent=71 // pred_region
          %s1530 = smul.u32 8, %s29
          %s1532 = ssub.s32 1024, 1024
          %1533 = vsyncadd %s1523, %s1532
          %s1534 = smul.addr %s1530, 128
          %s1535 = scalar_lea.hbm %s13, %s1534
          %s1536 = sshll.u32 %s1526, 4
          %s1537 = int_to_ptr.vmem [resolvable:$true] %s1536
          %1542 = dma.vmem_to_hbm [thread:$0]  %s1537, 1024, %s1535, %s1523, 128, 128, 8
        $region84: #{tpu_custom_call.1} parent=71 // pred_fallthru
          _
      $region72: #{tpu_custom_call.1} parent=5 // pred_fallthru
        _
      %p1543 = scmp.le.s32.totalorder 2, %s24
      // Predicated region
      $region85: #{tpu_custom_call.1} parent=5 // pred_check
        %p1544 = pneg %p1543
      $region86: #{tpu_custom_call.1} parent=5 // pred_check_branch
        %1546 = sbr.rel (%p1544) target = $region88
      $region87: #{tpu_custom_call.1} parent=5 // pred_region
        %s1547 = ssub.s32 %s24, 2
        // Predicated region
        $region89: #{tpu_custom_call.1} parent=87 // pred_check
          %p1548 = pneg %p351
        $region90: #{tpu_custom_call.1} parent=87 // pred_check_branch
          %1550 = sbr.rel (%p1548) target = $region92
        $region91: #{tpu_custom_call.1} parent=87 // pred_region
          %s1551 = sand.u32 %s336, 1
          %s1552 = scalar_lea.sflag [#allocation4], %s1551
          %s1553 = sand.u32 %s336, 1
          %s1554 = smul.addr %s1553, 64
          %s1555 = scalar_lea.vmem [#allocation7], %s1554
          %1556 = dma.done %s1552, 1024
        $region92: #{tpu_custom_call.1} parent=87 // pred_fallthru
          _
      $region88: #{tpu_custom_call.1} parent=5 // pred_fallthru
        _
    $region6: #{tpu_custom_call.1} parent=1 // loop_footer
      %s28 = sadd.s32 1, %s24
    $region7: #{tpu_custom_call.1} parent=1 // loop_footer_branch
      %23 = sbr.rel target = $region3
    $region8: #{tpu_custom_call.1} parent=1 // loop_exit
      _
    %1557 = vsyncpa [#allocation3], 1
    %s1558 = scalar_lea.sflag [#allocation3], 1
    %1559 = vsyncpa %s1558, 1
    %1560 = vsyncpa [#allocation4], 1
    %s1561 = scalar_lea.sflag [#allocation4], 1
    %1562 = vsyncpa %s1561, 1
    %1563 = vsyncpa [#allocation5], 1
    %s1564 = scalar_lea.sflag [#allocation5], 1
    %1565 = vsyncpa %s1564, 1

</llo_original>
